<compile_context>
chip_gen: v6e
topology: v6e:2x2x1
jax: 0.10.0
libtpu: 0.0.40
codegen_flags: <defaults>
</compile_context>

<pallas_src>
import functools

import jax
import jax.numpy as jnp
from jax.experimental import pallas as pl
from jax.experimental.pallas import tpu as pltpu


def _se_kernel(x_ref, w1_ref, w2_ref, out_ref, *, inv_hw):
  """x_ref/out_ref: (nb, H*W, C) VMEM tiles; w1: (C, Csq); w2: (Csq, C)."""
  # ---- squeeze: global average pool over the spatial (sublane) axis --------
  # Accumulate in f32, computed in a single expression from the ref so the
  # full f32 copy of the tile is not held live across the excitation chain.
  pooled = jnp.sum(x_ref[...].astype(jnp.float32), axis=1) * inv_hw   # (nb, C)

  # ---- excite: fc1 -> ReLU -> fc2 -> sigmoid --------------------------------
  # M = nb rows: these matmuls are latency-only (MXU is idle either way).
  z = jnp.maximum(
      jnp.dot(pooled, w1_ref[...], preferred_element_type=jnp.float32), 0.0)
  s = jax.nn.sigmoid(
      jnp.dot(z, w2_ref[...], preferred_element_type=jnp.float32))    # (nb, C)

  # ---- scale: per-channel broadcast multiply over all spatial positions ----
  # Re-read the tile (vld is essentially free here) and multiply in the
  # activation dtype (halves vreg/vst bytes for bf16 inputs on v6e/v7x).
  out_ref[...] = (x_ref[...] * s.astype(x_ref.dtype)[:, None, :]).astype(
      out_ref.dtype)


def _round_up(x, m):
  return ((x + m - 1) // m) * m


def se_module_forward(x_nhwc, w1, w2, *, images_per_step=None):
  """SEModule forward.

  x_nhwc: (N, H, W, C) activations.
  w1: (C, Csq)  == PyTorch fc[0].weight[:, :, 0, 0].T
  w2: (Csq, C)  == PyTorch fc[2].weight[:, :, 0, 0].T
  """
  N, H, W, C = x_nhwc.shape
  Csq = w1.shape[-1]
  assert w1.shape == (C, Csq) and w2.shape == (Csq, C)
  HW = H * W
  x_itemsize = jnp.dtype(x_nhwc.dtype).itemsize
  w_itemsize = jnp.dtype(w1.dtype).itemsize

  # ---- lane padding: keep the channel (lane) axis a multiple of 128 so the
  # output store stays an unmasked `vst`.  Skip when padding would more than
  # double HBM traffic (tiny channel counts).
  C_pad = _round_up(C, 128)
  if C_pad > 2 * C:
    C_pad = C
  if C_pad != C:
    w1 = jnp.pad(w1, ((0, C_pad - C), (0, 0)))
    w2 = jnp.pad(w2, ((0, 0), (0, C_pad - C)))

  per_image_bytes = HW * C_pad * x_itemsize

  # ---- pick images per grid step --------------------------------------------
  # Biggest block that (a) keeps the double-buffered in+out footprint inside a
  # conservative VMEM budget, (b) is ~1-2 MiB so per-step overhead (~0.35 us)
  # is amortised, and (c) leaves >= ~4 grid steps when the batch allows it so
  # both v7x TensorCores get pipeline depth.
  if images_per_step is None:
    vmem_budget = 24 << 20
    target_block = 2 << 20
    min_grid_steps = 4
    nb = max(1, min(N,
                    vmem_budget // (4 * per_image_bytes),
                    max(1, target_block // per_image_bytes)))
    if N > min_grid_steps:
      nb = min(nb, max(1, N // min_grid_steps))
  else:
    nb = images_per_step
  nb = int(max(1, nb))

  # ---- batch padding so the grid divides exactly (padded images are zeros:
  # pooled mean 0 -> gate 0.5 -> zero activations stay zero; sliced off below).
  N_pad = _round_up(N, nb)

  # Free reshape (NHWC is contiguous): dense (HW, C) tile per image.
  x2 = x_nhwc.reshape(N, HW, C)
  if C_pad != C or N_pad != N:
    x2 = jnp.pad(x2, ((0, N_pad - N), (0, 0), (0, C_pad - C)))

  kernel = functools.partial(_se_kernel, inv_hw=1.0 / HW)
  const2d = lambda n: (0, 0)   # weights: same block every step -> DMA'd once

  w_bytes = (w1.size + w2.size) * w_itemsize
  cost = pl.CostEstimate(
      flops=int(N_pad * (2 * HW * C_pad + 4 * C_pad * Csq)),
      transcendentals=int(N_pad * C_pad),
      bytes_accessed=int(2 * N_pad * HW * C_pad * x_itemsize + w_bytes))

  # VMEM: 2x-buffered input + 2x-buffered output blocks + weights + headroom.
  vmem_needed = 4 * nb * per_image_bytes + 2 * w_bytes + (4 << 20)
  vmem_limit = int(min(max(vmem_needed, 32 << 20), 64 << 20))

  out = pl.pallas_call(
      kernel,
      out_shape=jax.ShapeDtypeStruct((N_pad, HW, C_pad), x_nhwc.dtype),
      grid_spec=pltpu.PrefetchScalarGridSpec(
          num_scalar_prefetch=0,
          grid=(N_pad // nb,),
          in_specs=[
              pl.BlockSpec((nb, HW, C_pad), lambda n: (n, 0, 0)),  # activations
              pl.BlockSpec((C_pad, Csq), const2d),                 # SE fc1
              pl.BlockSpec((Csq, C_pad), const2d),                 # SE fc2
          ],
          out_specs=pl.BlockSpec((nb, HW, C_pad), lambda n: (n, 0, 0)),
      ),
      compiler_params=pltpu.CompilerParams(
          dimension_semantics=("parallel",),   # shard steps across TCs (v7x)
          vmem_limit_bytes=vmem_limit),
      cost_estimate=cost,
  )(x2, w1, w2)

  out = out[:N, :, :C]
  return out.reshape(N, H, W, C)


# ------------------------------ pure-JAX reference ----------------------------

def ref_forward(x_nhwc, w1, w2):
  m = jnp.mean(x_nhwc, axis=(1, 2))                   # (N, C)
  z = jnp.maximum(m @ w1, 0.0)
  s = jax.nn.sigmoid(z @ w2)
  return x_nhwc * s[:, None, None, :]


if __name__ == "__main__":
  # Small shapes consistent with the module (C divisible by squeeze_factor;
  # C=128 keeps the lane axis dense).  N=32 gives the auto-tiler room to pick
  # multi-image blocks with several grid steps (~4 MiB total input).
  N, C, H, W = 32, 128, 16, 16
  squeeze_factor = 16
  Csq = C // squeeze_factor

  key = jax.random.PRNGKey(0)
  kx, k1, k2 = jax.random.split(key, 3)

  x_nchw = jax.random.normal(kx, (N, C, H, W), jnp.float32)   # PyTorch layout
  x = jnp.transpose(x_nchw, (0, 2, 3, 1))                     # -> NHWC (glue)

  # 1x1 bias-free convs on a (1,1) feature map == matmuls on the pooled vector
  # (torch weights of shape (Cout, Cin, 1, 1), squeezed and transposed).
  w1 = 0.2 * jax.random.normal(k1, (C, Csq), jnp.float32)
  w2 = 0.2 * jax.random.normal(k2, (Csq, C), jnp.float32)

  out = se_module_forward(x, w1, w2)
  out = jax.block_until_ready(out)

  ref = ref_forward(x, w1, w2)
  assert out.shape == ref.shape == (N, H, W, C), (out.shape, ref.shape)
  err = float(jnp.max(jnp.abs(out - ref)))
  assert err < 1e-4, f"max abs error too large: {err}"

  print("KERNEL_OK")
</pallas_src>

<mosaic_0001>
module attributes {stable_mosaic.version = 11 : i64} {
  func.func @_se_kernel(%arg0: i32, %arg1: memref<8x256x128xf32, #tpu.memory_space<vmem>>, %arg2: memref<128x8xf32, #tpu.memory_space<vmem>>, %arg3: memref<8x128xf32, #tpu.memory_space<vmem>>, %arg4: memref<8x256x128xf32, #tpu.memory_space<vmem>>) attributes {dimension_semantics = [#tpu.dimension_semantics<parallel>], iteration_bounds = array<i64: 4>, scalar_prefetch = 0 : i64, scratch_operands = 0 : i64, tpu.core_type = #tpu.core_type<tc>, window_params = [{transform_indices = @transform_0, window_bounds = array<i64: 8, 256, 128>}, {pipeline_mode = #tpu.pipeline_mode<synchronous>, transform_indices = @transform_1, window_bounds = array<i64: 128, 8>}, {pipeline_mode = #tpu.pipeline_mode<synchronous>, transform_indices = @transform_2, window_bounds = array<i64: 8, 128>}, {transform_indices = @transform_3, window_bounds = array<i64: 8, 256, 128>}]} {
    %c0 = arith.constant 0 : index
    %c0_0 = arith.constant 0 : index
    %c0_1 = arith.constant 0 : index
    %0 = vector.load %arg1[%c0, %c0_0, %c0_1] : memref<8x256x128xf32, #tpu.memory_space<vmem>>, vector<8x256x128xf32>
    %cst = arith.constant dense<0.000000e+00> : vector<8x128xf32>
    %1 = vector.multi_reduction <add>, %0, %cst [1] : vector<8x256x128xf32> to vector<8x128xf32>
    %cst_2 = arith.constant 3.906250e-03 : f32
    %2 = vector.broadcast %cst_2 : f32 to vector<8x128xf32>
    %3 = arith.mulf %1, %2 : vector<8x128xf32>
    %c0_3 = arith.constant 0 : index
    %c0_4 = arith.constant 0 : index
    %4 = vector.load %arg2[%c0_3, %c0_4] : memref<128x8xf32, #tpu.memory_space<vmem>>, vector<128x8xf32>
    %cst_5 = arith.constant dense<0.000000e+00> : vector<8x8xf32>
    %5 = tpu.matmul %3, %4, %cst_5 {dimension_numbers = #tpu.dot_dimension_numbers<[1], [0], [0], [1], [0, 0, 1, 1], [], []>} : vector<8x128xf32>, vector<128x8xf32>, vector<8x8xf32> -> vector<8x8xf32>
    %cst_6 = arith.constant 0.000000e+00 : f32
    %6 = vector.broadcast %cst_6 : f32 to vector<8x8xf32>
    %7 = arith.maximumf %5, %6 : vector<8x8xf32>
    %c0_7 = arith.constant 0 : index
    %c0_8 = arith.constant 0 : index
    %8 = vector.load %arg3[%c0_7, %c0_8] : memref<8x128xf32, #tpu.memory_space<vmem>>, vector<8x128xf32>
    %cst_9 = arith.constant dense<0.000000e+00> : vector<8x128xf32>
    %9 = tpu.matmul %7, %8, %cst_9 {dimension_numbers = #tpu.dot_dimension_numbers<[1], [0], [0], [1], [0, 0, 1, 1], [], []>} : vector<8x8xf32>, vector<8x128xf32>, vector<8x128xf32> -> vector<8x128xf32>
    %10 = arith.negf %9 : vector<8x128xf32>
    %11 = math.exp %10 : vector<8x128xf32>
    %cst_10 = arith.constant 1.000000e+00 : f32
    %12 = vector.broadcast %cst_10 : f32 to vector<8x128xf32>
    %13 = arith.addf %12, %11 : vector<8x128xf32>
    %14 = arith.divf %12, %13 : vector<8x128xf32>
    %c0_11 = arith.constant 0 : index
    %c0_12 = arith.constant 0 : index
    %c0_13 = arith.constant 0 : index
    %15 = vector.load %arg1[%c0_11, %c0_12, %c0_13] : memref<8x256x128xf32, #tpu.memory_space<vmem>>, vector<8x256x128xf32>
    %16 = vector.shape_cast %14 : vector<8x128xf32> to vector<8x1x128xf32>
    %17 = vector.broadcast %16 : vector<8x1x128xf32> to vector<8x256x128xf32>
    %18 = arith.mulf %15, %17 : vector<8x256x128xf32>
    %c0_14 = arith.constant 0 : index
    %c0_15 = arith.constant 0 : index
    %c0_16 = arith.constant 0 : index
    %19 = vector.load %arg4[%c0_14, %c0_15, %c0_16] : memref<8x256x128xf32, #tpu.memory_space<vmem>>, vector<8x256x128xf32>
    tpu.vector_store %arg4[%c0_14, %c0_15, %c0_16], %18 {strides = array<i32>} : memref<8x256x128xf32, #tpu.memory_space<vmem>>, vector<8x256x128xf32>,
    return
  }
  func.func @transform_0(%arg0: i32) -> (i32, i32, i32) {
    %c0_i32 = arith.constant 0 : i32
    %c0_i32_0 = arith.constant 0 : i32
    %c0_i32_1 = arith.constant 0 : i32
    return %arg0, %c0_i32, %c0_i32_0 : i32, i32, i32
  }
  func.func @transform_1(%arg0: i32) -> (i32, i32) {
    %c0_i32 = arith.constant 0 : i32
    %c0_i32_0 = arith.constant 0 : i32
    %c0_i32_1 = arith.constant 0 : i32
    return %c0_i32, %c0_i32_0 : i32, i32
  }
  func.func @transform_2(%arg0: i32) -> (i32, i32) {
    %c0_i32 = arith.constant 0 : i32
    %c0_i32_0 = arith.constant 0 : i32
    %c0_i32_1 = arith.constant 0 : i32
    return %c0_i32, %c0_i32_0 : i32, i32
  }
  func.func @transform_3(%arg0: i32) -> (i32, i32, i32) {
    %c0_i32 = arith.constant 0 : i32
    %c0_i32_0 = arith.constant 0 : i32
    %c0_i32_1 = arith.constant 0 : i32
    return %arg0, %c0_i32, %c0_i32_0 : i32, i32, i32
  }
}

</mosaic_0001>

<llo_original>
// kernel: tpu_custom_call.1
$region0: #{tpu_custom_call.1}
  #allocation0 [shape = 'u32[]', space=smem, size = 0x4, offset = 0x4, fixed_abs, tag = 'smem constant byte address 0x4 - core index']
  #allocation1 [shape = 'u32[144,128]{1,0:T(1,128)}', space=vmem, size = 0x12000, scoped, tag = 'internal scratch']
  %s0 = inlined_call_operand.hbm [shape: f32[32,256,128], index: 0, kind: input, shape index: {}]
  %s1 = inlined_call_operand.vmem [shape: f32[128,8], index: 1, kind: input, shape index: {}]
  %s2 = inlined_call_operand.hbm [shape: f32[8,128], index: 2, kind: input, shape index: {}]
  %s3 = inlined_call_operand.hbm [shape: f32[32,256,128], index: 3, kind: output, shape index: {}]
  %s4 = sld [smem:[#allocation0]]
  $region53: #{tpu_custom_call.1} parent=0
    _
  %s6 = ssub.s32 1, %s4
  %s7 = scalar_select 0, %s6, %s4
  $region1: #{tpu_custom_call.1} parent=0
    #allocation2 [shape = 'u8[2097152]{0}', space=vmem, size = 0x200000, scoped, tag = 'input window, operand 0']
    #allocation3 [shape = 's32[2]{0}', space=sflag, size = 0x8, scoped, tag = 'scoped memory for tpu_custom_call.1']
    #allocation4 [shape = 's32[2]{0}', space=sflag, size = 0x8, scoped, tag = 'scoped memory for tpu_custom_call.1']
    #allocation5 [shape = 'u8[4096]{0}', space=vmem, size = 0x1000, scoped, tag = 'input window, operand 2, single buffered']
    #allocation6 [shape = 's32[1]{0}', space=sflag, size = 0x4, scoped, tag = 'scoped memory for tpu_custom_call.1']
    #allocation7 [shape = 'u8[2097152]{0}', space=vmem, size = 0x200000, scoped, tag = 'output window, operand 0']
    %8 = vsyncpa [#allocation3], 0
    %s9 = scalar_lea.sflag [#allocation3], 1
    %10 = vsyncpa %s9, 0
    %11 = vsyncpa [#allocation6], 0
    %12 = vsyncpa [#allocation4], 0
    %s13 = scalar_lea.sflag [#allocation4], 1
    %14 = vsyncpa %s13, 0
    loop: start=0, step=1, limit=6
    $region2: #{tpu_custom_call.1} parent=1 // loop_pre_header
      _
    $region3: #{tpu_custom_call.1} parent=1 // loop_header
      %s16 = sphi 0, %s20
      %p17 = scmp.ge.s32.totalorder %s16, 6
      %s26 = sphi 0, %s28
      %s29 = sphi 0, %s26
      %s30 = sphi 0, %s29
      %s46 = sphi 0, %s30
      %s50 = sphi 0, %s50
      %s52 = sphi 0, %s50
      %s53 = sphi 0, %s52
      %s67 = sphi 0, %s53
      %s71 = sphi 0, %s71
      %s73 = sphi 0, %s71
      %s74 = sphi 0, %s73
      %s88 = sphi 0, %s74
      %s94 = sphi 0, %s96
      %s97 = sphi 0, %s94
      %s98 = sphi 0, %s97
      %s114 = sphi 0, %s98
    $region4: #{tpu_custom_call.1} parent=1 // loop_header_branch
      %19 = sbr.rel (%p17) target = $region8
    $region5: #{tpu_custom_call.1} parent=1 // loop_body
      %s21 = ssub.s32 %s16, 1
      %s22 = ssub.s32 %s16, 2
      %s23 = sadd.s32 %s16, 1
      %s24 = ssub.s32 %s16, %s23
      %p25 = scmp.eq.s32.totalorder %s24, 0
      %s27 = sadd.s32 %s26, 1
      %s28 = scalar_select %p25, %s26, %s27
      %p31 = pneg %p25
      %p32 = scmp.eq.s32.totalorder %s16, 3
      %p33 = por %p31, %p32
      %p34 = scmp.ne.s32.totalorder %s26, %s29
      %p35 = scmp.eq.s32.totalorder %s16, 0
      %p36 = por %p34, %p35
      %p37 = scmp.ne.s32.totalorder %s26, %s29
      %p38 = scmp.eq.s32.totalorder %s21, 3
      %p39 = por %p37, %p38
      %p40 = scmp.ne.s32.totalorder %s29, %s30
      %p41 = scmp.eq.s32.totalorder %s21, 0
      %p42 = por %p40, %p41
      %p43 = scmp.ne.s32.totalorder %s29, %s30
      %p44 = scmp.eq.s32.totalorder %s22, 3
      %p45 = por %p43, %p44
      %p47 = scmp.ne.s32.totalorder %s30, %s46
      %p48 = scmp.eq.s32.totalorder %s22, 0
      %p49 = por %p47, %p48
      %s51 = sadd.s32 %s50, 1
      %p54 = scmp.eq.s32.totalorder %s16, 3
      %p55 = scmp.ne.s32.totalorder %s50, %s52
      %p56 = scmp.eq.s32.totalorder %s16, 0
      %p57 = por %p55, %p56
      %p58 = scmp.ne.s32.totalorder %s50, %s52
      %p59 = scmp.eq.s32.totalorder %s21, 3
      %p60 = por %p58, %p59
      %p61 = scmp.ne.s32.totalorder %s52, %s53
      %p62 = scmp.eq.s32.totalorder %s21, 0
      %p63 = por %p61, %p62
      %p64 = scmp.ne.s32.totalorder %s52, %s53
      %p65 = scmp.eq.s32.totalorder %s22, 3
      %p66 = por %p64, %p65
      %p68 = scmp.ne.s32.totalorder %s53, %s67
      %p69 = scmp.eq.s32.totalorder %s22, 0
      %p70 = por %p68, %p69
      %s72 = sadd.s32 %s71, 1
      %p75 = scmp.eq.s32.totalorder %s16, 3
      %p76 = scmp.ne.s32.totalorder %s71, %s73
      %p77 = scmp.eq.s32.totalorder %s16, 0
      %p78 = por %p76, %p77
      %p79 = scmp.ne.s32.totalorder %s71, %s73
      %p80 = scmp.eq.s32.totalorder %s21, 3
      %p81 = por %p79, %p80
      %p82 = scmp.ne.s32.totalorder %s73, %s74
      %p83 = scmp.eq.s32.totalorder %s21, 0
      %p84 = por %p82, %p83
      %p85 = scmp.ne.s32.totalorder %s73, %s74
      %p86 = scmp.eq.s32.totalorder %s22, 3
      %p87 = por %p85, %p86
      %p89 = scmp.ne.s32.totalorder %s74, %s88
      %p90 = scmp.eq.s32.totalorder %s22, 0
      %p91 = por %p89, %p90
      %s92 = ssub.s32 %s16, %s23
      %p93 = scmp.eq.s32.totalorder %s92, 0
      %s95 = sadd.s32 %s94, 1
      %s96 = scalar_select %p93, %s94, %s95
      %p99 = pneg %p93
      %p100 = scmp.eq.s32.totalorder %s16, 3
      %p101 = por %p99, %p100
      %p102 = scmp.ne.s32.totalorder %s94, %s97
      %p103 = scmp.eq.s32.totalorder %s16, 0
      %p104 = por %p102, %p103
      %p105 = scmp.ne.s32.totalorder %s94, %s97
      %p106 = scmp.eq.s32.totalorder %s21, 3
      %p107 = por %p105, %p106
      %p108 = scmp.ne.s32.totalorder %s97, %s98
      %p109 = scmp.eq.s32.totalorder %s21, 0
      %p110 = por %p108, %p109
      %p111 = scmp.ne.s32.totalorder %s97, %s98
      %p112 = scmp.eq.s32.totalorder %s22, 3
      %p113 = por %p111, %p112
      %p115 = scmp.ne.s32.totalorder %s98, %s114
      %p116 = scmp.eq.s32.totalorder %s22, 0
      %p117 = por %p115, %p116
      %p118 = scmp.le.s32.totalorder 1, %s16
      %p119 = scmp.lt.s32.totalorder %s16, 5
      %p120 = pnand %p118, %p119
      %p121 = pneg %p120
      // Predicated region
      $region9: #{tpu_custom_call.1} parent=5 // pred_check
        _
      $region10: #{tpu_custom_call.1} parent=5 // pred_check_branch
        %123 = sbr.rel (%p120) target = $region12
      $region11: #{tpu_custom_call.1} parent=5 // pred_region
        %s124 = ssub.s32 %s16, 1
        // Predicated region
        $region13: #{tpu_custom_call.1} parent=11 // pred_check
          %p125 = pneg %p63
        $region14: #{tpu_custom_call.1} parent=11 // pred_check_branch
          %127 = sbr.rel (%p125) target = $region16
        $region15: #{tpu_custom_call.1} parent=11 // pred_region
          _
        $region16: #{tpu_custom_call.1} parent=11 // pred_fallthru
          _
        // Predicated region
        $region17: #{tpu_custom_call.1} parent=11 // pred_check
          %p128 = pneg %p84
        $region18: #{tpu_custom_call.1} parent=11 // pred_check_branch
          %130 = sbr.rel (%p128) target = $region20
        $region19: #{tpu_custom_call.1} parent=11 // pred_region
          %s132 = ssub.s32 128, 128
          %133 = vsyncadd [#allocation6], %s132
          %s135 = sshll.u32 [#allocation5], 4
          %s136 = int_to_ptr.vmem [resolvable:$true] %s135
          %138 = dma.hbm_to_vmem [thread:$0]  %s2, 128, %s136, [#allocation6]
        $region20: #{tpu_custom_call.1} parent=11 // pred_fallthru
          _
      $region12: #{tpu_custom_call.1} parent=5 // pred_fallthru
        _
      %p139 = scmp.lt.s32.totalorder %s16, 4
      // Predicated region
      $region21: #{tpu_custom_call.1} parent=5 // pred_check
        %p140 = pneg %p139
      $region22: #{tpu_custom_call.1} parent=5 // pred_check_branch
        %142 = sbr.rel (%p140) target = $region24
      $region23: #{tpu_custom_call.1} parent=5 // pred_region
        // Predicated region
        $region25: #{tpu_custom_call.1} parent=23 // pred_check
          %p143 = pneg %p36
        $region26: #{tpu_custom_call.1} parent=23 // pred_check_branch
          %145 = sbr.rel (%p143) target = $region28
        $region27: #{tpu_custom_call.1} parent=23 // pred_region
          %s146 = sand.u32 %s26, 1
          %s147 = scalar_lea.sflag [#allocation3], %s146
          %s148 = sand.u32 %s26, 1
          %s149 = smul.addr %s148, 2048
          %s150 = scalar_lea.vmem [#allocation2], %s149
          %s151 = smul.u32 8, %s16
          %s153 = ssub.s32 32768, 32768
          %154 = vsyncadd %s147, %s153
          %s155 = smul.addr %s151, 32
          %s156 = smul.addr %s155, 128
          %s157 = scalar_lea.hbm %s0, %s156
          %s158 = sshll.u32 %s150, 4
          %s159 = int_to_ptr.vmem [resolvable:$true] %s158
          %164 = dma.hbm_to_vmem [thread:$0]  %s157, 32768, %s159, %s147, 128, 128, 8
        $region28: #{tpu_custom_call.1} parent=23 // pred_fallthru
          _
      $region24: #{tpu_custom_call.1} parent=5 // pred_fallthru
        _
      %p165 = scmp.le.s32.totalorder 1, %s16
      %p166 = scmp.lt.s32.totalorder %s16, 5
      %p167 = pnand %p165, %p166
      %p168 = pneg %p167
      // Predicated region
      $region29: #{tpu_custom_call.1} parent=5 // pred_check
        _
      $region30: #{tpu_custom_call.1} parent=5 // pred_check_branch
        %170 = sbr.rel (%p167) target = $region32
      $region31: #{tpu_custom_call.1} parent=5 // pred_region
        %s171 = ssub.s32 %s16, 1
        %s172 = sand.u32 %s29, 1
        %s173 = scalar_lea.sflag [#allocation3], %s172
        %s174 = sand.u32 %s29, 1
        %s175 = smul.addr %s174, 2048
        %s176 = scalar_lea.vmem [#allocation2], %s175
        // Predicated region
        $region33: #{tpu_custom_call.1} parent=31 // pred_check
          %p177 = pneg %p42
        $region34: #{tpu_custom_call.1} parent=31 // pred_check_branch
          %179 = sbr.rel (%p177) target = $region36
        $region35: #{tpu_custom_call.1} parent=31 // pred_region
          %180 = dma.done %s173, 32768
        $region36: #{tpu_custom_call.1} parent=31 // pred_fallthru
          _
        // Predicated region
        $region37: #{tpu_custom_call.1} parent=31 // pred_check
          %p181 = pneg %p84
        $region38: #{tpu_custom_call.1} parent=31 // pred_check_branch
          %183 = sbr.rel (%p181) target = $region40
        $region39: #{tpu_custom_call.1} parent=31 // pred_region
          %184 = dma.done [#allocation6], 128
        $region40: #{tpu_custom_call.1} parent=31 // pred_fallthru
          _
        %s185 = sand.u32 %s29, 1
        %s186 = scalar_lea.sflag [#allocation3], %s185
        %s187 = sand.u32 %s29, 1
        %s188 = smul.addr %s187, 2048
        %s189 = scalar_lea.vmem [#allocation2], %s188
        %p190 = pneg %p42
        %p191 = pneg %p39
        %p192 = pneg %p63
        %p193 = pneg %p60
        %p194 = pneg %p84
        %p195 = pneg %p81
        %p196 = pneg %p110
        %p197 = pneg %p107
        %s198 = sand.u32 %s97, 1
        %s199 = scalar_lea.sflag [#allocation4], %s198
        %s200 = sand.u32 %s97, 1
        %s201 = smul.addr %s200, 2048
        %s202 = scalar_lea.vmem [#allocation7], %s201
        %s203 = smul.u32 8, %s21
        %s204 = smul.u32 8, %s21
        %v205 = vld [vmem:[%s176] sm:$0xff]
        %v206 = vld [vmem:[%s176 + $0x8] sm:$0xff]
        %v207 = vld [vmem:[%s176 + $0x10] sm:$0xff]
        %v208 = vld [vmem:[%s176 + $0x18] sm:$0xff]
        %v209 = vld [vmem:[%s176 + $0x20] sm:$0xff]
        %v210 = vld [vmem:[%s176 + $0x28] sm:$0xff]
        %v211 = vld [vmem:[%s176 + $0x30] sm:$0xff]
        %v212 = vld [vmem:[%s176 + $0x38] sm:$0xff]
        %v213 = vld [vmem:[%s176 + $0x40] sm:$0xff]
        %v214 = vld [vmem:[%s176 + $0x48] sm:$0xff]
        %v215 = vld [vmem:[%s176 + $0x50] sm:$0xff]
        %v216 = vld [vmem:[%s176 + $0x58] sm:$0xff]
        %v217 = vld [vmem:[%s176 + $0x60] sm:$0xff]
        %v218 = vld [vmem:[%s176 + $0x68] sm:$0xff]
        %v219 = vld [vmem:[%s176 + $0x70] sm:$0xff]
        %v220 = vld [vmem:[%s176 + $0x78] sm:$0xff]
        %v221 = vld [vmem:[%s176 + $0x80] sm:$0xff]
        %v222 = vld [vmem:[%s176 + $0x88] sm:$0xff]
        %v223 = vld [vmem:[%s176 + $0x90] sm:$0xff]
        %v224 = vld [vmem:[%s176 + $0x98] sm:$0xff]
        %v225 = vld [vmem:[%s176 + $0xa0] sm:$0xff]
        %v226 = vld [vmem:[%s176 + $0xa8] sm:$0xff]
        %v227 = vld [vmem:[%s176 + $0xb0] sm:$0xff]
        %v228 = vld [vmem:[%s176 + $0xb8] sm:$0xff]
        %v229 = vld [vmem:[%s176 + $0xc0] sm:$0xff]
        %v230 = vld [vmem:[%s176 + $0xc8] sm:$0xff]
        %v231 = vld [vmem:[%s176 + $0xd0] sm:$0xff]
        %v232 = vld [vmem:[%s176 + $0xd8] sm:$0xff]
        %v233 = vld [vmem:[%s176 + $0xe0] sm:$0xff]
        %v234 = vld [vmem:[%s176 + $0xe8] sm:$0xff]
        %v235 = vld [vmem:[%s176 + $0xf0] sm:$0xff]
        %v236 = vld [vmem:[%s176 + $0xf8] sm:$0xff]
        %v237 = vld [vmem:[%s176 + $0x100] sm:$0xff]
        %v238 = vld [vmem:[%s176 + $0x108] sm:$0xff]
        %v239 = vld [vmem:[%s176 + $0x110] sm:$0xff]
        %v240 = vld [vmem:[%s176 + $0x118] sm:$0xff]
        %v241 = vld [vmem:[%s176 + $0x120] sm:$0xff]
        %v242 = vld [vmem:[%s176 + $0x128] sm:$0xff]
        %v243 = vld [vmem:[%s176 + $0x130] sm:$0xff]
        %v244 = vld [vmem:[%s176 + $0x138] sm:$0xff]
        %v245 = vld [vmem:[%s176 + $0x140] sm:$0xff]
        %v246 = vld [vmem:[%s176 + $0x148] sm:$0xff]
        %v247 = vld [vmem:[%s176 + $0x150] sm:$0xff]
        %v248 = vld [vmem:[%s176 + $0x158] sm:$0xff]
        %v249 = vld [vmem:[%s176 + $0x160] sm:$0xff]
        %v250 = vld [vmem:[%s176 + $0x168] sm:$0xff]
        %v251 = vld [vmem:[%s176 + $0x170] sm:$0xff]
        %v252 = vld [vmem:[%s176 + $0x178] sm:$0xff]
        %v253 = vld [vmem:[%s176 + $0x180] sm:$0xff]
        %v254 = vld [vmem:[%s176 + $0x188] sm:$0xff]
        %v255 = vld [vmem:[%s176 + $0x190] sm:$0xff]
        %v256 = vld [vmem:[%s176 + $0x198] sm:$0xff]
        %v257 = vld [vmem:[%s176 + $0x1a0] sm:$0xff]
        %v258 = vld [vmem:[%s176 + $0x1a8] sm:$0xff]
        %v259 = vld [vmem:[%s176 + $0x1b0] sm:$0xff]
        %v260 = vld [vmem:[%s176 + $0x1b8] sm:$0xff]
        %v261 = vld [vmem:[%s176 + $0x1c0] sm:$0xff]
        %v262 = vld [vmem:[%s176 + $0x1c8] sm:$0xff]
        %v263 = vld [vmem:[%s176 + $0x1d0] sm:$0xff]
        %v264 = vld [vmem:[%s176 + $0x1d8] sm:$0xff]
        %v265 = vld [vmem:[%s176 + $0x1e0] sm:$0xff]
        %v266 = vld [vmem:[%s176 + $0x1e8] sm:$0xff]
        %v267 = vld [vmem:[%s176 + $0x1f0] sm:$0xff]
        %v268 = vld [vmem:[%s176 + $0x1f8] sm:$0xff]
        %v269 = vld [vmem:[%s176 + $0x200] sm:$0xff]
        %v270 = vld [vmem:[%s176 + $0x208] sm:$0xff]
        %v271 = vld [vmem:[%s176 + $0x210] sm:$0xff]
        %v272 = vld [vmem:[%s176 + $0x218] sm:$0xff]
        %v273 = vld [vmem:[%s176 + $0x220] sm:$0xff]
        %v274 = vld [vmem:[%s176 + $0x228] sm:$0xff]
        %v275 = vld [vmem:[%s176 + $0x230] sm:$0xff]
        %v276 = vld [vmem:[%s176 + $0x238] sm:$0xff]
        %v277 = vld [vmem:[%s176 + $0x240] sm:$0xff]
        %v278 = vld [vmem:[%s176 + $0x248] sm:$0xff]
        %v279 = vld [vmem:[%s176 + $0x250] sm:$0xff]
        %v280 = vld [vmem:[%s176 + $0x258] sm:$0xff]
        %v281 = vld [vmem:[%s176 + $0x260] sm:$0xff]
        %v282 = vld [vmem:[%s176 + $0x268] sm:$0xff]
        %v283 = vld [vmem:[%s176 + $0x270] sm:$0xff]
        %v284 = vld [vmem:[%s176 + $0x278] sm:$0xff]
        %v285 = vld [vmem:[%s176 + $0x280] sm:$0xff]
        %v286 = vld [vmem:[%s176 + $0x288] sm:$0xff]
        %v287 = vld [vmem:[%s176 + $0x290] sm:$0xff]
        %v288 = vld [vmem:[%s176 + $0x298] sm:$0xff]
        %v289 = vld [vmem:[%s176 + $0x2a0] sm:$0xff]
        %v290 = vld [vmem:[%s176 + $0x2a8] sm:$0xff]
        %v291 = vld [vmem:[%s176 + $0x2b0] sm:$0xff]
        %v292 = vld [vmem:[%s176 + $0x2b8] sm:$0xff]
        %v293 = vld [vmem:[%s176 + $0x2c0] sm:$0xff]
        %v294 = vld [vmem:[%s176 + $0x2c8] sm:$0xff]
        %v295 = vld [vmem:[%s176 + $0x2d0] sm:$0xff]
        %v296 = vld [vmem:[%s176 + $0x2d8] sm:$0xff]
        %v297 = vld [vmem:[%s176 + $0x2e0] sm:$0xff]
        %v298 = vld [vmem:[%s176 + $0x2e8] sm:$0xff]
        %v299 = vld [vmem:[%s176 + $0x2f0] sm:$0xff]
        %v300 = vld [vmem:[%s176 + $0x2f8] sm:$0xff]
        %v301 = vld [vmem:[%s176 + $0x300] sm:$0xff]
        %v302 = vld [vmem:[%s176 + $0x308] sm:$0xff]
        %v303 = vld [vmem:[%s176 + $0x310] sm:$0xff]
        %v304 = vld [vmem:[%s176 + $0x318] sm:$0xff]
        %v305 = vld [vmem:[%s176 + $0x320] sm:$0xff]
        %v306 = vld [vmem:[%s176 + $0x328] sm:$0xff]
        %v307 = vld [vmem:[%s176 + $0x330] sm:$0xff]
        %v308 = vld [vmem:[%s176 + $0x338] sm:$0xff]
        %v309 = vld [vmem:[%s176 + $0x340] sm:$0xff]
        %v310 = vld [vmem:[%s176 + $0x348] sm:$0xff]
        %v311 = vld [vmem:[%s176 + $0x350] sm:$0xff]
        %v312 = vld [vmem:[%s176 + $0x358] sm:$0xff]
        %v313 = vld [vmem:[%s176 + $0x360] sm:$0xff]
        %v314 = vld [vmem:[%s176 + $0x368] sm:$0xff]
        %v315 = vld [vmem:[%s176 + $0x370] sm:$0xff]
        %v316 = vld [vmem:[%s176 + $0x378] sm:$0xff]
        %v317 = vld [vmem:[%s176 + $0x380] sm:$0xff]
        %v318 = vld [vmem:[%s176 + $0x388] sm:$0xff]
        %v319 = vld [vmem:[%s176 + $0x390] sm:$0xff]
        %v320 = vld [vmem:[%s176 + $0x398] sm:$0xff]
        %v321 = vld [vmem:[%s176 + $0x3a0] sm:$0xff]
        %v322 = vld [vmem:[%s176 + $0x3a8] sm:$0xff]
        %v323 = vld [vmem:[%s176 + $0x3b0] sm:$0xff]
        %v324 = vld [vmem:[%s176 + $0x3b8] sm:$0xff]
        %v325 = vld [vmem:[%s176 + $0x3c0] sm:$0xff]
        %v326 = vld [vmem:[%s176 + $0x3c8] sm:$0xff]
        %v327 = vld [vmem:[%s176 + $0x3d0] sm:$0xff]
        %v328 = vld [vmem:[%s176 + $0x3d8] sm:$0xff]
        %v329 = vld [vmem:[%s176 + $0x3e0] sm:$0xff]
        %v330 = vld [vmem:[%s176 + $0x3e8] sm:$0xff]
        %v331 = vld [vmem:[%s176 + $0x3f0] sm:$0xff]
        %v332 = vld [vmem:[%s176 + $0x3f8] sm:$0xff]
        %v333 = vld [vmem:[%s176 + $0x400] sm:$0xff]
        %v334 = vld [vmem:[%s176 + $0x408] sm:$0xff]
        %v335 = vld [vmem:[%s176 + $0x410] sm:$0xff]
        %v336 = vld [vmem:[%s176 + $0x418] sm:$0xff]
        %v337 = vld [vmem:[%s176 + $0x420] sm:$0xff]
        %v338 = vld [vmem:[%s176 + $0x428] sm:$0xff]
        %v339 = vld [vmem:[%s176 + $0x430] sm:$0xff]
        %v340 = vld [vmem:[%s176 + $0x438] sm:$0xff]
        %v341 = vld [vmem:[%s176 + $0x440] sm:$0xff]
        %v342 = vld [vmem:[%s176 + $0x448] sm:$0xff]
        %v343 = vld [vmem:[%s176 + $0x450] sm:$0xff]
        %v344 = vld [vmem:[%s176 + $0x458] sm:$0xff]
        %v345 = vld [vmem:[%s176 + $0x460] sm:$0xff]
        %v346 = vld [vmem:[%s176 + $0x468] sm:$0xff]
        %v347 = vld [vmem:[%s176 + $0x470] sm:$0xff]
        %v348 = vld [vmem:[%s176 + $0x478] sm:$0xff]
        %v349 = vld [vmem:[%s176 + $0x480] sm:$0xff]
        %v350 = vld [vmem:[%s176 + $0x488] sm:$0xff]
        %v351 = vld [vmem:[%s176 + $0x490] sm:$0xff]
        %v352 = vld [vmem:[%s176 + $0x498] sm:$0xff]
        %v353 = vld [vmem:[%s176 + $0x4a0] sm:$0xff]
        %v354 = vld [vmem:[%s176 + $0x4a8] sm:$0xff]
        %v355 = vld [vmem:[%s176 + $0x4b0] sm:$0xff]
        %v356 = vld [vmem:[%s176 + $0x4b8] sm:$0xff]
        %v357 = vld [vmem:[%s176 + $0x4c0] sm:$0xff]
        %v358 = vld [vmem:[%s176 + $0x4c8] sm:$0xff]
        %v359 = vld [vmem:[%s176 + $0x4d0] sm:$0xff]
        %v360 = vld [vmem:[%s176 + $0x4d8] sm:$0xff]
        %v361 = vld [vmem:[%s176 + $0x4e0] sm:$0xff]
        %v362 = vld [vmem:[%s176 + $0x4e8] sm:$0xff]
        %v363 = vld [vmem:[%s176 + $0x4f0] sm:$0xff]
        %v364 = vld [vmem:[%s176 + $0x4f8] sm:$0xff]
        %v365 = vld [vmem:[%s176 + $0x500] sm:$0xff]
        %v366 = vld [vmem:[%s176 + $0x508] sm:$0xff]
        %v367 = vld [vmem:[%s176 + $0x510] sm:$0xff]
        %v368 = vld [vmem:[%s176 + $0x518] sm:$0xff]
        %v369 = vld [vmem:[%s176 + $0x520] sm:$0xff]
        %v370 = vld [vmem:[%s176 + $0x528] sm:$0xff]
        %v371 = vld [vmem:[%s176 + $0x530] sm:$0xff]
        %v372 = vld [vmem:[%s176 + $0x538] sm:$0xff]
        %v373 = vld [vmem:[%s176 + $0x540] sm:$0xff]
        %v374 = vld [vmem:[%s176 + $0x548] sm:$0xff]
        %v375 = vld [vmem:[%s176 + $0x550] sm:$0xff]
        %v376 = vld [vmem:[%s176 + $0x558] sm:$0xff]
        %v377 = vld [vmem:[%s176 + $0x560] sm:$0xff]
        %v378 = vld [vmem:[%s176 + $0x568] sm:$0xff]
        %v379 = vld [vmem:[%s176 + $0x570] sm:$0xff]
        %v380 = vld [vmem:[%s176 + $0x578] sm:$0xff]
        %v381 = vld [vmem:[%s176 + $0x580] sm:$0xff]
        %v382 = vld [vmem:[%s176 + $0x588] sm:$0xff]
        %v383 = vld [vmem:[%s176 + $0x590] sm:$0xff]
        %v384 = vld [vmem:[%s176 + $0x598] sm:$0xff]
        %v385 = vld [vmem:[%s176 + $0x5a0] sm:$0xff]
        %v386 = vld [vmem:[%s176 + $0x5a8] sm:$0xff]
        %v387 = vld [vmem:[%s176 + $0x5b0] sm:$0xff]
        %v388 = vld [vmem:[%s176 + $0x5b8] sm:$0xff]
        %v389 = vld [vmem:[%s176 + $0x5c0] sm:$0xff]
        %v390 = vld [vmem:[%s176 + $0x5c8] sm:$0xff]
        %v391 = vld [vmem:[%s176 + $0x5d0] sm:$0xff]
        %v392 = vld [vmem:[%s176 + $0x5d8] sm:$0xff]
        %v393 = vld [vmem:[%s176 + $0x5e0] sm:$0xff]
        %v394 = vld [vmem:[%s176 + $0x5e8] sm:$0xff]
        %v395 = vld [vmem:[%s176 + $0x5f0] sm:$0xff]
        %v396 = vld [vmem:[%s176 + $0x5f8] sm:$0xff]
        %v397 = vld [vmem:[%s176 + $0x600] sm:$0xff]
        %v398 = vld [vmem:[%s176 + $0x608] sm:$0xff]
        %v399 = vld [vmem:[%s176 + $0x610] sm:$0xff]
        %v400 = vld [vmem:[%s176 + $0x618] sm:$0xff]
        %v401 = vld [vmem:[%s176 + $0x620] sm:$0xff]
        %v402 = vld [vmem:[%s176 + $0x628] sm:$0xff]
        %v403 = vld [vmem:[%s176 + $0x630] sm:$0xff]
        %v404 = vld [vmem:[%s176 + $0x638] sm:$0xff]
        %v405 = vld [vmem:[%s176 + $0x640] sm:$0xff]
        %v406 = vld [vmem:[%s176 + $0x648] sm:$0xff]
        %v407 = vld [vmem:[%s176 + $0x650] sm:$0xff]
        %v408 = vld [vmem:[%s176 + $0x658] sm:$0xff]
        %v409 = vld [vmem:[%s176 + $0x660] sm:$0xff]
        %v410 = vld [vmem:[%s176 + $0x668] sm:$0xff]
        %v411 = vld [vmem:[%s176 + $0x670] sm:$0xff]
        %v412 = vld [vmem:[%s176 + $0x678] sm:$0xff]
        %v413 = vld [vmem:[%s176 + $0x680] sm:$0xff]
        %v414 = vld [vmem:[%s176 + $0x688] sm:$0xff]
        %v415 = vld [vmem:[%s176 + $0x690] sm:$0xff]
        %v416 = vld [vmem:[%s176 + $0x698] sm:$0xff]
        %v417 = vld [vmem:[%s176 + $0x6a0] sm:$0xff]
        %v418 = vld [vmem:[%s176 + $0x6a8] sm:$0xff]
        %v419 = vld [vmem:[%s176 + $0x6b0] sm:$0xff]
        %v420 = vld [vmem:[%s176 + $0x6b8] sm:$0xff]
        %v421 = vld [vmem:[%s176 + $0x6c0] sm:$0xff]
        %v422 = vld [vmem:[%s176 + $0x6c8] sm:$0xff]
        %v423 = vld [vmem:[%s176 + $0x6d0] sm:$0xff]
        %v424 = vld [vmem:[%s176 + $0x6d8] sm:$0xff]
        %v425 = vld [vmem:[%s176 + $0x6e0] sm:$0xff]
        %v426 = vld [vmem:[%s176 + $0x6e8] sm:$0xff]
        %v427 = vld [vmem:[%s176 + $0x6f0] sm:$0xff]
        %v428 = vld [vmem:[%s176 + $0x6f8] sm:$0xff]
        %v429 = vld [vmem:[%s176 + $0x700] sm:$0xff]
        %v430 = vld [vmem:[%s176 + $0x708] sm:$0xff]
        %v431 = vld [vmem:[%s176 + $0x710] sm:$0xff]
        %v432 = vld [vmem:[%s176 + $0x718] sm:$0xff]
        %v433 = vld [vmem:[%s176 + $0x720] sm:$0xff]
        %v434 = vld [vmem:[%s176 + $0x728] sm:$0xff]
        %v435 = vld [vmem:[%s176 + $0x730] sm:$0xff]
        %v436 = vld [vmem:[%s176 + $0x738] sm:$0xff]
        %v437 = vld [vmem:[%s176 + $0x740] sm:$0xff]
        %v438 = vld [vmem:[%s176 + $0x748] sm:$0xff]
        %v439 = vld [vmem:[%s176 + $0x750] sm:$0xff]
        %v440 = vld [vmem:[%s176 + $0x758] sm:$0xff]
        %v441 = vld [vmem:[%s176 + $0x760] sm:$0xff]
        %v442 = vld [vmem:[%s176 + $0x768] sm:$0xff]
        %v443 = vld [vmem:[%s176 + $0x770] sm:$0xff]
        %v444 = vld [vmem:[%s176 + $0x778] sm:$0xff]
        %v445 = vld [vmem:[%s176 + $0x780] sm:$0xff]
        %v446 = vld [vmem:[%s176 + $0x788] sm:$0xff]
        %v447 = vld [vmem:[%s176 + $0x790] sm:$0xff]
        %v448 = vld [vmem:[%s176 + $0x798] sm:$0xff]
        %v449 = vld [vmem:[%s176 + $0x7a0] sm:$0xff]
        %v450 = vld [vmem:[%s176 + $0x7a8] sm:$0xff]
        %v451 = vld [vmem:[%s176 + $0x7b0] sm:$0xff]
        %v452 = vld [vmem:[%s176 + $0x7b8] sm:$0xff]
        %v453 = vld [vmem:[%s176 + $0x7c0] sm:$0xff]
        %v454 = vld [vmem:[%s176 + $0x7c8] sm:$0xff]
        %v455 = vld [vmem:[%s176 + $0x7d0] sm:$0xff]
        %v456 = vld [vmem:[%s176 + $0x7d8] sm:$0xff]
        %v457 = vld [vmem:[%s176 + $0x7e0] sm:$0xff]
        %v458 = vld [vmem:[%s176 + $0x7e8] sm:$0xff]
        %v459 = vld [vmem:[%s176 + $0x7f0] sm:$0xff]
        %v460 = vld [vmem:[%s176 + $0x7f8] sm:$0xff]
        %v461 = vadd.f32 %v205, %v206
        %v462 = vadd.f32 %v461, %v207
        %v463 = vadd.f32 %v462, %v208
        %v464 = vadd.f32 %v463, %v209
        %v465 = vadd.f32 %v464, %v210
        %v466 = vadd.f32 %v465, %v211
        %v467 = vadd.f32 %v466, %v212
        %v468 = vadd.f32 %v467, %v213
        %v469 = vadd.f32 %v468, %v214
        %v470 = vadd.f32 %v469, %v215
        %v471 = vadd.f32 %v470, %v216
        %v472 = vadd.f32 %v471, %v217
        %v473 = vadd.f32 %v472, %v218
        %v474 = vadd.f32 %v473, %v219
        %v475 = vadd.f32 %v474, %v220
        %v476 = vadd.f32 %v475, %v221
        %v477 = vadd.f32 %v476, %v222
        %v478 = vadd.f32 %v477, %v223
        %v479 = vadd.f32 %v478, %v224
        %v480 = vadd.f32 %v479, %v225
        %v481 = vadd.f32 %v480, %v226
        %v482 = vadd.f32 %v481, %v227
        %v483 = vadd.f32 %v482, %v228
        %v484 = vadd.f32 %v483, %v229
        %v485 = vadd.f32 %v484, %v230
        %v486 = vadd.f32 %v485, %v231
        %v487 = vadd.f32 %v486, %v232
        %v488 = vadd.f32 %v487, %v233
        %v489 = vadd.f32 %v488, %v234
        %v490 = vadd.f32 %v489, %v235
        %v491 = vadd.f32 %v490, %v236
        %v492 = vrot.slane %v491, 4
        %v493 = vadd.f32 %v491, %v492
        %v494 = vrot.slane %v493, 2
        %v495 = vadd.f32 %v493, %v494
        %v496 = vrot.slane %v495, 1
        %v497 = vadd.f32 %v495, %v496
        %v498 = vadd.f32 %v237, %v238
        %v499 = vadd.f32 %v498, %v239
        %v500 = vadd.f32 %v499, %v240
        %v501 = vadd.f32 %v500, %v241
        %v502 = vadd.f32 %v501, %v242
        %v503 = vadd.f32 %v502, %v243
        %v504 = vadd.f32 %v503, %v244
        %v505 = vadd.f32 %v504, %v245
        %v506 = vadd.f32 %v505, %v246
        %v507 = vadd.f32 %v506, %v247
        %v508 = vadd.f32 %v507, %v248
        %v509 = vadd.f32 %v508, %v249
        %v510 = vadd.f32 %v509, %v250
        %v511 = vadd.f32 %v510, %v251
        %v512 = vadd.f32 %v511, %v252
        %v513 = vadd.f32 %v512, %v253
        %v514 = vadd.f32 %v513, %v254
        %v515 = vadd.f32 %v514, %v255
        %v516 = vadd.f32 %v515, %v256
        %v517 = vadd.f32 %v516, %v257
        %v518 = vadd.f32 %v517, %v258
        %v519 = vadd.f32 %v518, %v259
        %v520 = vadd.f32 %v519, %v260
        %v521 = vadd.f32 %v520, %v261
        %v522 = vadd.f32 %v521, %v262
        %v523 = vadd.f32 %v522, %v263
        %v524 = vadd.f32 %v523, %v264
        %v525 = vadd.f32 %v524, %v265
        %v526 = vadd.f32 %v525, %v266
        %v527 = vadd.f32 %v526, %v267
        %v528 = vadd.f32 %v527, %v268
        %v529 = vrot.slane %v528, 4
        %v530 = vadd.f32 %v528, %v529
        %v531 = vrot.slane %v530, 2
        %v532 = vadd.f32 %v530, %v531
        %v533 = vrot.slane %v532, 1
        %v534 = vadd.f32 %v532, %v533
        %v535 = vadd.f32 %v269, %v270
        %v536 = vadd.f32 %v535, %v271
        %v537 = vadd.f32 %v536, %v272
        %v538 = vadd.f32 %v537, %v273
        %v539 = vadd.f32 %v538, %v274
        %v540 = vadd.f32 %v539, %v275
        %v541 = vadd.f32 %v540, %v276
        %v542 = vadd.f32 %v541, %v277
        %v543 = vadd.f32 %v542, %v278
        %v544 = vadd.f32 %v543, %v279
        %v545 = vadd.f32 %v544, %v280
        %v546 = vadd.f32 %v545, %v281
        %v547 = vadd.f32 %v546, %v282
        %v548 = vadd.f32 %v547, %v283
        %v549 = vadd.f32 %v548, %v284
        %v550 = vadd.f32 %v549, %v285
        %v551 = vadd.f32 %v550, %v286
        %v552 = vadd.f32 %v551, %v287
        %v553 = vadd.f32 %v552, %v288
        %v554 = vadd.f32 %v553, %v289
        %v555 = vadd.f32 %v554, %v290
        %v556 = vadd.f32 %v555, %v291
        %v557 = vadd.f32 %v556, %v292
        %v558 = vadd.f32 %v557, %v293
        %v559 = vadd.f32 %v558, %v294
        %v560 = vadd.f32 %v559, %v295
        %v561 = vadd.f32 %v560, %v296
        %v562 = vadd.f32 %v561, %v297
        %v563 = vadd.f32 %v562, %v298
        %v564 = vadd.f32 %v563, %v299
        %v565 = vadd.f32 %v564, %v300
        %v566 = vrot.slane %v565, 4
        %v567 = vadd.f32 %v565, %v566
        %v568 = vrot.slane %v567, 2
        %v569 = vadd.f32 %v567, %v568
        %v570 = vrot.slane %v569, 1
        %v571 = vadd.f32 %v569, %v570
        %v572 = vadd.f32 %v301, %v302
        %v573 = vadd.f32 %v572, %v303
        %v574 = vadd.f32 %v573, %v304
        %v575 = vadd.f32 %v574, %v305
        %v576 = vadd.f32 %v575, %v306
        %v577 = vadd.f32 %v576, %v307
        %v578 = vadd.f32 %v577, %v308
        %v579 = vadd.f32 %v578, %v309
        %v580 = vadd.f32 %v579, %v310
        %v581 = vadd.f32 %v580, %v311
        %v582 = vadd.f32 %v581, %v312
        %v583 = vadd.f32 %v582, %v313
        %v584 = vadd.f32 %v583, %v314
        %v585 = vadd.f32 %v584, %v315
        %v586 = vadd.f32 %v585, %v316
        %v587 = vadd.f32 %v586, %v317
        %v588 = vadd.f32 %v587, %v318
        %v589 = vadd.f32 %v588, %v319
        %v590 = vadd.f32 %v589, %v320
        %v591 = vadd.f32 %v590, %v321
        %v592 = vadd.f32 %v591, %v322
        %v593 = vadd.f32 %v592, %v323
        %v594 = vadd.f32 %v593, %v324
        %v595 = vadd.f32 %v594, %v325
        %v596 = vadd.f32 %v595, %v326
        %v597 = vadd.f32 %v596, %v327
        %v598 = vadd.f32 %v597, %v328
        %v599 = vadd.f32 %v598, %v329
        %v600 = vadd.f32 %v599, %v330
        %v601 = vadd.f32 %v600, %v331
        %v602 = vadd.f32 %v601, %v332
        %v603 = vrot.slane %v602, 4
        %v604 = vadd.f32 %v602, %v603
        %v605 = vrot.slane %v604, 2
        %v606 = vadd.f32 %v604, %v605
        %v607 = vrot.slane %v606, 1
        %v608 = vadd.f32 %v606, %v607
        %v609 = vadd.f32 %v333, %v334
        %v610 = vadd.f32 %v609, %v335
        %v611 = vadd.f32 %v610, %v336
        %v612 = vadd.f32 %v611, %v337
        %v613 = vadd.f32 %v612, %v338
        %v614 = vadd.f32 %v613, %v339
        %v615 = vadd.f32 %v614, %v340
        %v616 = vadd.f32 %v615, %v341
        %v617 = vadd.f32 %v616, %v342
        %v618 = vadd.f32 %v617, %v343
        %v619 = vadd.f32 %v618, %v344
        %v620 = vadd.f32 %v619, %v345
        %v621 = vadd.f32 %v620, %v346
        %v622 = vadd.f32 %v621, %v347
        %v623 = vadd.f32 %v622, %v348
        %v624 = vadd.f32 %v623, %v349
        %v625 = vadd.f32 %v624, %v350
        %v626 = vadd.f32 %v625, %v351
        %v627 = vadd.f32 %v626, %v352
        %v628 = vadd.f32 %v627, %v353
        %v629 = vadd.f32 %v628, %v354
        %v630 = vadd.f32 %v629, %v355
        %v631 = vadd.f32 %v630, %v356
        %v632 = vadd.f32 %v631, %v357
        %v633 = vadd.f32 %v632, %v358
        %v634 = vadd.f32 %v633, %v359
        %v635 = vadd.f32 %v634, %v360
        %v636 = vadd.f32 %v635, %v361
        %v637 = vadd.f32 %v636, %v362
        %v638 = vadd.f32 %v637, %v363
        %v639 = vadd.f32 %v638, %v364
        %v640 = vrot.slane %v639, 4
        %v641 = vadd.f32 %v639, %v640
        %v642 = vrot.slane %v641, 2
        %v643 = vadd.f32 %v641, %v642
        %v644 = vrot.slane %v643, 1
        %v645 = vadd.f32 %v643, %v644
        %v646 = vadd.f32 %v365, %v366
        %v647 = vadd.f32 %v646, %v367
        %v648 = vadd.f32 %v647, %v368
        %v649 = vadd.f32 %v648, %v369
        %v650 = vadd.f32 %v649, %v370
        %v651 = vadd.f32 %v650, %v371
        %v652 = vadd.f32 %v651, %v372
        %v653 = vadd.f32 %v652, %v373
        %v654 = vadd.f32 %v653, %v374
        %v655 = vadd.f32 %v654, %v375
        %v656 = vadd.f32 %v655, %v376
        %v657 = vadd.f32 %v656, %v377
        %v658 = vadd.f32 %v657, %v378
        %v659 = vadd.f32 %v658, %v379
        %v660 = vadd.f32 %v659, %v380
        %v661 = vadd.f32 %v660, %v381
        %v662 = vadd.f32 %v661, %v382
        %v663 = vadd.f32 %v662, %v383
        %v664 = vadd.f32 %v663, %v384
        %v665 = vadd.f32 %v664, %v385
        %v666 = vadd.f32 %v665, %v386
        %v667 = vadd.f32 %v666, %v387
        %v668 = vadd.f32 %v667, %v388
        %v669 = vadd.f32 %v668, %v389
        %v670 = vadd.f32 %v669, %v390
        %v671 = vadd.f32 %v670, %v391
        %v672 = vadd.f32 %v671, %v392
        %v673 = vadd.f32 %v672, %v393
        %v674 = vadd.f32 %v673, %v394
        %v675 = vadd.f32 %v674, %v395
        %v676 = vadd.f32 %v675, %v396
        %v677 = vrot.slane %v676, 4
        %v678 = vadd.f32 %v676, %v677
        %v679 = vrot.slane %v678, 2
        %v680 = vadd.f32 %v678, %v679
        %v681 = vrot.slane %v680, 1
        %v682 = vadd.f32 %v680, %v681
        %v683 = vadd.f32 %v397, %v398
        %v684 = vadd.f32 %v683, %v399
        %v685 = vadd.f32 %v684, %v400
        %v686 = vadd.f32 %v685, %v401
        %v687 = vadd.f32 %v686, %v402
        %v688 = vadd.f32 %v687, %v403
        %v689 = vadd.f32 %v688, %v404
        %v690 = vadd.f32 %v689, %v405
        %v691 = vadd.f32 %v690, %v406
        %v692 = vadd.f32 %v691, %v407
        %v693 = vadd.f32 %v692, %v408
        %v694 = vadd.f32 %v693, %v409
        %v695 = vadd.f32 %v694, %v410
        %v696 = vadd.f32 %v695, %v411
        %v697 = vadd.f32 %v696, %v412
        %v698 = vadd.f32 %v697, %v413
        %v699 = vadd.f32 %v698, %v414
        %v700 = vadd.f32 %v699, %v415
        %v701 = vadd.f32 %v700, %v416
        %v702 = vadd.f32 %v701, %v417
        %v703 = vadd.f32 %v702, %v418
        %v704 = vadd.f32 %v703, %v419
        %v705 = vadd.f32 %v704, %v420
        %v706 = vadd.f32 %v705, %v421
        %v707 = vadd.f32 %v706, %v422
        %v708 = vadd.f32 %v707, %v423
        %v709 = vadd.f32 %v708, %v424
        %v710 = vadd.f32 %v709, %v425
        %v711 = vadd.f32 %v710, %v426
        %v712 = vadd.f32 %v711, %v427
        %v713 = vadd.f32 %v712, %v428
        %v714 = vrot.slane %v713, 4
        %v715 = vadd.f32 %v713, %v714
        %v716 = vrot.slane %v715, 2
        %v717 = vadd.f32 %v715, %v716
        %v718 = vrot.slane %v717, 1
        %v719 = vadd.f32 %v717, %v718
        %v720 = vadd.f32 %v429, %v430
        %v721 = vadd.f32 %v720, %v431
        %v722 = vadd.f32 %v721, %v432
        %v723 = vadd.f32 %v722, %v433
        %v724 = vadd.f32 %v723, %v434
        %v725 = vadd.f32 %v724, %v435
        %v726 = vadd.f32 %v725, %v436
        %v727 = vadd.f32 %v726, %v437
        %v728 = vadd.f32 %v727, %v438
        %v729 = vadd.f32 %v728, %v439
        %v730 = vadd.f32 %v729, %v440
        %v731 = vadd.f32 %v730, %v441
        %v732 = vadd.f32 %v731, %v442
        %v733 = vadd.f32 %v732, %v443
        %v734 = vadd.f32 %v733, %v444
        %v735 = vadd.f32 %v734, %v445
        %v736 = vadd.f32 %v735, %v446
        %v737 = vadd.f32 %v736, %v447
        %v738 = vadd.f32 %v737, %v448
        %v739 = vadd.f32 %v738, %v449
        %v740 = vadd.f32 %v739, %v450
        %v741 = vadd.f32 %v740, %v451
        %v742 = vadd.f32 %v741, %v452
        %v743 = vadd.f32 %v742, %v453
        %v744 = vadd.f32 %v743, %v454
        %v745 = vadd.f32 %v744, %v455
        %v746 = vadd.f32 %v745, %v456
        %v747 = vadd.f32 %v746, %v457
        %v748 = vadd.f32 %v747, %v458
        %v749 = vadd.f32 %v748, %v459
        %v750 = vadd.f32 %v749, %v460
        %v751 = vrot.slane %v750, 4
        %v752 = vadd.f32 %v750, %v751
        %v753 = vrot.slane %v752, 2
        %v754 = vadd.f32 %v752, %v753
        %v755 = vrot.slane %v754, 1
        %v756 = vadd.f32 %v754, %v755
        %v757 = vmul.f32 %v497, 0.00390625
        %v758 = vmul.f32 %v534, 0.00390625
        %v759 = vmul.f32 %v571, 0.00390625
        %v760 = vmul.f32 %v608, 0.00390625
        %v761 = vmul.f32 %v645, 0.00390625
        %v762 = vmul.f32 %v682, 0.00390625
        %v763 = vmul.f32 %v719, 0.00390625
        %v764 = vmul.f32 %v756, 0.00390625
        %v765 = vld [vmem:[%s1] sm:$0xff]
        %v766 = vld [vmem:[%s1 + $0x8] sm:$0xff]
        %v767 = vld [vmem:[%s1 + $0x10] sm:$0xff]
        %v768 = vld [vmem:[%s1 + $0x18] sm:$0xff]
        %v769 = vld [vmem:[%s1 + $0x20] sm:$0xff]
        %v770 = vld [vmem:[%s1 + $0x28] sm:$0xff]
        %v771 = vld [vmem:[%s1 + $0x30] sm:$0xff]
        %v772 = vld [vmem:[%s1 + $0x38] sm:$0xff]
        %v773 = vld [vmem:[%s1 + $0x40] sm:$0xff]
        %v774 = vld [vmem:[%s1 + $0x48] sm:$0xff]
        %v775 = vld [vmem:[%s1 + $0x50] sm:$0xff]
        %v776 = vld [vmem:[%s1 + $0x58] sm:$0xff]
        %v777 = vld [vmem:[%s1 + $0x60] sm:$0xff]
        %v778 = vld [vmem:[%s1 + $0x68] sm:$0xff]
        %v779 = vld [vmem:[%s1 + $0x70] sm:$0xff]
        %v780 = vld [vmem:[%s1 + $0x78] sm:$0xff]
        %vm789 = vcmask 1041409
        %v790 = vsel %vm789, %v758, %v757
        %vm791 = vcmask 1042434
        %v792 = vsel %vm791, %v759, %v790
        %vm793 = vcmask 1043459
        %v794 = vsel %vm793, %v760, %v792
        %vm795 = vcmask 1044484
        %v796 = vsel %vm795, %v761, %v794
        %vm797 = vcmask 1045509
        %v798 = vsel %vm797, %v762, %v796
        %vm799 = vcmask 1046534
        %v800 = vsel %vm799, %v763, %v798
        %vm801 = vcmask 1047559
        %v802 = vsel %vm801, %v764, %v800
        %804 = vmatprep.subr.mxu0 0.0
        %805 = vmatpush1.msra.mxu0 %v780
        %806 = vmatprep.subr.mxu0 0.0
        %807 = vmatpush1.msra.mxu0 %v779
        %808 = vmatprep.subr.mxu0 0.0
        %809 = vmatpush1.msra.mxu0 %v778
        %810 = vmatprep.subr.mxu0 0.0
        %811 = vmatpush1.msra.mxu0 %v777
        %812 = vmatprep.subr.mxu0 0.0
        %813 = vmatpush1.msra.mxu0 %v776
        %814 = vmatprep.subr.mxu0 0.0
        %815 = vmatpush1.msra.mxu0 %v775
        %816 = vmatprep.subr.mxu0 0.0
        %817 = vmatpush1.msra.mxu0 %v774
        %818 = vmatprep.subr.mxu0 0.0
        %819 = vmatpush1.msra.mxu0 %v773
        %820 = vmatprep.subr.mxu0 0.0
        %821 = vmatpush1.msra.mxu0 %v772
        %822 = vmatprep.subr.mxu0 0.0
        %823 = vmatpush1.msra.mxu0 %v771
        %824 = vmatprep.subr.mxu0 0.0
        %825 = vmatpush1.msra.mxu0 %v770
        %826 = vmatprep.subr.mxu0 0.0
        %827 = vmatpush1.msra.mxu0 %v769
        %828 = vmatprep.subr.mxu0 0.0
        %829 = vmatpush1.msra.mxu0 %v768
        %830 = vmatprep.subr.mxu0 0.0
        %831 = vmatpush1.msra.mxu0 %v767
        %832 = vmatprep.subr.mxu0 0.0
        %833 = vmatpush1.msra.mxu0 %v766
        %834 = vmatprep.subr.mxu0 0.0
        %835 = vmatpush1.msra.mxu0 %v765
        %836 = vmatprep.subr.mxu0 0.0
        %837 = vmatpush2.msra.mxu0 0.0
        %838 = vmatprep.subr.mxu0 0.0
        %839 = vmatpush2.msra.mxu0 0.0
        %840 = vmatprep.subr.mxu0 0.0
        %841 = vmatpush2.msra.mxu0 0.0
        %842 = vmatprep.subr.mxu0 0.0
        %843 = vmatpush2.msra.mxu0 0.0
        %844 = vmatprep.subr.mxu0 0.0
        %845 = vmatpush2.msra.mxu0 0.0
        %846 = vmatprep.subr.mxu0 0.0
        %847 = vmatpush2.msra.mxu0 0.0
        %848 = vmatprep.subr.mxu0 0.0
        %849 = vmatpush2.msra.mxu0 0.0
        %850 = vmatprep.subr.mxu0 0.0
        %851 = vmatpush2.msra.mxu0 0.0
        %852 = vmatprep.subr.mxu0 0.0
        %853 = vmatpush2.msra.mxu0 0.0
        %854 = vmatprep.subr.mxu0 0.0
        %855 = vmatpush2.msra.mxu0 0.0
        %856 = vmatprep.subr.mxu0 0.0
        %857 = vmatpush2.msra.mxu0 0.0
        %858 = vmatprep.subr.mxu0 0.0
        %859 = vmatpush2.msra.mxu0 0.0
        %860 = vmatprep.subr.mxu0 0.0
        %861 = vmatpush2.msra.mxu0 0.0
        %862 = vmatprep.subr.mxu0 0.0
        %863 = vmatpush2.msra.mxu0 0.0
        %864 = vmatprep.subr.mxu0 0.0
        %865 = vmatpush2.msra.mxu0 0.0
        %866 = vmatprep.subr.mxu0 0.0
        %867 = vmatpush2.msra.mxu0 0.0
        %868 = vmatprep.mubr.f32.mxu0 0.0
        %869 = vmatmul.mubr.f32.gmra.mxu0 %v802
        %v870 = vpop.f32.mrf.mxu0
        %v871 = vadd.f32 0.0, %v870
        %v872 = vpop.f32.mrf.mxu0
        %873 = vdwg.mxu0
        %v874 = vmax.f32 %v871, 0.0
        %v875 = vld [vmem:[#allocation5] sm:$0xff]
        %vm876 = vcmask 64512
        %v878 = vsel %vm876, %v874, 0
        %880 = vmatprep.subr.mxu0 0.0
        %881 = vmatpush1.msra.mxu0 0.0
        %882 = vmatprep.subr.mxu0 0.0
        %883 = vmatpush1.msra.mxu0 0.0
        %884 = vmatprep.subr.mxu0 0.0
        %885 = vmatpush1.msra.mxu0 0.0
        %886 = vmatprep.subr.mxu0 0.0
        %887 = vmatpush1.msra.mxu0 0.0
        %888 = vmatprep.subr.mxu0 0.0
        %889 = vmatpush1.msra.mxu0 0.0
        %890 = vmatprep.subr.mxu0 0.0
        %891 = vmatpush1.msra.mxu0 0.0
        %892 = vmatprep.subr.mxu0 0.0
        %893 = vmatpush1.msra.mxu0 0.0
        %894 = vmatprep.subr.mxu0 0.0
        %895 = vmatpush1.msra.mxu0 0.0
        %896 = vmatprep.subr.mxu0 0.0
        %897 = vmatpush1.msra.mxu0 0.0
        %898 = vmatprep.subr.mxu0 0.0
        %899 = vmatpush1.msra.mxu0 0.0
        %900 = vmatprep.subr.mxu0 0.0
        %901 = vmatpush1.msra.mxu0 0.0
        %902 = vmatprep.subr.mxu0 0.0
        %903 = vmatpush1.msra.mxu0 0.0
        %904 = vmatprep.subr.mxu0 0.0
        %905 = vmatpush1.msra.mxu0 0.0
        %906 = vmatprep.subr.mxu0 0.0
        %907 = vmatpush1.msra.mxu0 0.0
        %908 = vmatprep.subr.mxu0 0.0
        %909 = vmatpush1.msra.mxu0 0.0
        %910 = vmatprep.subr.mxu0 0.0
        %911 = vmatpush1.msra.mxu0 %v875
        %912 = vmatprep.subr.mxu0 0.0
        %913 = vmatpush2.msra.mxu0 0.0
        %914 = vmatprep.subr.mxu0 0.0
        %915 = vmatpush2.msra.mxu0 0.0
        %916 = vmatprep.subr.mxu0 0.0
        %917 = vmatpush2.msra.mxu0 0.0
        %918 = vmatprep.subr.mxu0 0.0
        %919 = vmatpush2.msra.mxu0 0.0
        %920 = vmatprep.subr.mxu0 0.0
        %921 = vmatpush2.msra.mxu0 0.0
        %922 = vmatprep.subr.mxu0 0.0
        %923 = vmatpush2.msra.mxu0 0.0
        %924 = vmatprep.subr.mxu0 0.0
        %925 = vmatpush2.msra.mxu0 0.0
        %926 = vmatprep.subr.mxu0 0.0
        %927 = vmatpush2.msra.mxu0 0.0
        %928 = vmatprep.subr.mxu0 0.0
        %929 = vmatpush2.msra.mxu0 0.0
        %930 = vmatprep.subr.mxu0 0.0
        %931 = vmatpush2.msra.mxu0 0.0
        %932 = vmatprep.subr.mxu0 0.0
        %933 = vmatpush2.msra.mxu0 0.0
        %934 = vmatprep.subr.mxu0 0.0
        %935 = vmatpush2.msra.mxu0 0.0
        %936 = vmatprep.subr.mxu0 0.0
        %937 = vmatpush2.msra.mxu0 0.0
        %938 = vmatprep.subr.mxu0 0.0
        %939 = vmatpush2.msra.mxu0 0.0
        %940 = vmatprep.subr.mxu0 0.0
        %941 = vmatpush2.msra.mxu0 0.0
        %942 = vmatprep.subr.mxu0 0.0
        %943 = vmatpush2.msra.mxu0 0.0
        %944 = vmatprep.mubr.f32.mxu0 0.0
        %945 = vmatmul.mubr.f32.gmra.mxu0 %v878
        %v946 = vpop.f32.mrf.mxu0
        %v947 = vadd.f32 0.0, %v946
        %v948 = vpop.f32.mrf.mxu0
        %949 = vdwg.mxu0
        %v950 = vxor.u32 %v947, 2147483648
        %v951 = vmul.f32 %v950, 1.442695
        %v952 = vpow.pop %v951
        %v953 = vadd.f32 %v952, 1.0
        %v954 = vrcp.pop %v953
        %v955 = vmul.f32 1.0, %v954
        %v957 = vcombine.high %v955, %v955
        %v959 = vunpack.c.l.s4 1966171168
        %v960 = vunpack.c.0.s8 %v959
        %v961 = vlaneseq
        %v962 = vshrl.u32 %v961, 7
        %v963 = vsub.s32 %v960, %v962
        %v964 = vrot.slane %v955, %v963
        %v966 = vunpack.c.l.s4 1966171168
        %v967 = vunpack.c.0.s8 %v966
        %v968 = vlaneseq
        %v969 = vshrl.u32 %v968, 7
        %v970 = vsub.s32 %v967, %v969
        %v971 = vrot.slane %v957, %v970
        %v972 = vcombine.high %v964, %v964
        %v973 = vcombine.high %v971, %v971
        %v975 = vunpack.c.l.s4 1966171168
        %v976 = vunpack.c.0.s8 %v975
        %v977 = vlaneseq
        %v978 = vshrl.u32 %v977, 7
        %v979 = vsub.s32 %v976, %v978
        %v980 = vrot.slane %v964, %v979
        %v982 = vunpack.c.l.s4 1966171168
        %v983 = vunpack.c.0.s8 %v982
        %v984 = vlaneseq
        %v985 = vshrl.u32 %v984, 7
        %v986 = vsub.s32 %v983, %v985
        %v987 = vrot.slane %v971, %v986
        %v989 = vunpack.c.l.s4 1966171168
        %v990 = vunpack.c.0.s8 %v989
        %v991 = vlaneseq
        %v992 = vshrl.u32 %v991, 7
        %v993 = vsub.s32 %v990, %v992
        %v994 = vrot.slane %v972, %v993
        %v996 = vunpack.c.l.s4 1966171168
        %v997 = vunpack.c.0.s8 %v996
        %v998 = vlaneseq
        %v999 = vshrl.u32 %v998, 7
        %v1000 = vsub.s32 %v997, %v999
        %v1001 = vrot.slane %v973, %v1000
        %v1002 = vcombine.high %v980, %v980
        %v1003 = vcombine.high %v987, %v987
        %v1004 = vcombine.high %v994, %v994
        %v1005 = vcombine.high %v1001, %v1001
        %v1006 = vlaneseq
        %v1007 = vshrl.u32 %v1006, 7
        %v1008 = vsub.s32 0, %v1007
        %v1009 = vrot.slane %v980, %v1008
        %v1010 = vlaneseq
        %v1011 = vshrl.u32 %v1010, 7
        %v1012 = vsub.s32 0, %v1011
        %v1013 = vrot.slane %v994, %v1012
        %v1014 = vlaneseq
        %v1015 = vshrl.u32 %v1014, 7
        %v1016 = vsub.s32 0, %v1015
        %v1017 = vrot.slane %v1002, %v1016
        %v1018 = vlaneseq
        %v1019 = vshrl.u32 %v1018, 7
        %v1020 = vsub.s32 0, %v1019
        %v1021 = vrot.slane %v1004, %v1020
        %v1022 = vlaneseq
        %v1023 = vshrl.u32 %v1022, 7
        %v1024 = vsub.s32 0, %v1023
        %v1025 = vrot.slane %v987, %v1024
        %v1026 = vlaneseq
        %v1027 = vshrl.u32 %v1026, 7
        %v1028 = vsub.s32 0, %v1027
        %v1029 = vrot.slane %v1001, %v1028
        %v1030 = vlaneseq
        %v1031 = vshrl.u32 %v1030, 7
        %v1032 = vsub.s32 0, %v1031
        %v1033 = vrot.slane %v1003, %v1032
        %v1034 = vlaneseq
        %v1035 = vshrl.u32 %v1034, 7
        %v1036 = vsub.s32 0, %v1035
        %v1037 = vrot.slane %v1005, %v1036
        %v1046 = vmul.f32 %v205, %v1009
        %v1047 = vmul.f32 %v206, %v1009
        %v1048 = vmul.f32 %v207, %v1009
        %v1049 = vmul.f32 %v208, %v1009
        %v1050 = vmul.f32 %v209, %v1009
        %v1051 = vmul.f32 %v210, %v1009
        %v1052 = vmul.f32 %v211, %v1009
        %v1053 = vmul.f32 %v212, %v1009
        %v1054 = vmul.f32 %v213, %v1009
        %v1055 = vmul.f32 %v214, %v1009
        %v1056 = vmul.f32 %v215, %v1009
        %v1057 = vmul.f32 %v216, %v1009
        %v1058 = vmul.f32 %v217, %v1009
        %v1059 = vmul.f32 %v218, %v1009
        %v1060 = vmul.f32 %v219, %v1009
        %v1061 = vmul.f32 %v220, %v1009
        %v1062 = vmul.f32 %v221, %v1009
        %v1063 = vmul.f32 %v222, %v1009
        %v1064 = vmul.f32 %v223, %v1009
        %v1065 = vmul.f32 %v224, %v1009
        %v1066 = vmul.f32 %v225, %v1009
        %v1067 = vmul.f32 %v226, %v1009
        %v1068 = vmul.f32 %v227, %v1009
        %v1069 = vmul.f32 %v228, %v1009
        %v1070 = vmul.f32 %v229, %v1009
        %v1071 = vmul.f32 %v230, %v1009
        %v1072 = vmul.f32 %v231, %v1009
        %v1073 = vmul.f32 %v232, %v1009
        %v1074 = vmul.f32 %v233, %v1009
        %v1075 = vmul.f32 %v234, %v1009
        %v1076 = vmul.f32 %v235, %v1009
        %v1077 = vmul.f32 %v236, %v1009
        %v1078 = vmul.f32 %v237, %v1013
        %v1079 = vmul.f32 %v238, %v1013
        %v1080 = vmul.f32 %v239, %v1013
        %v1081 = vmul.f32 %v240, %v1013
        %v1082 = vmul.f32 %v241, %v1013
        %v1083 = vmul.f32 %v242, %v1013
        %v1084 = vmul.f32 %v243, %v1013
        %v1085 = vmul.f32 %v244, %v1013
        %v1086 = vmul.f32 %v245, %v1013
        %v1087 = vmul.f32 %v246, %v1013
        %v1088 = vmul.f32 %v247, %v1013
        %v1089 = vmul.f32 %v248, %v1013
        %v1090 = vmul.f32 %v249, %v1013
        %v1091 = vmul.f32 %v250, %v1013
        %v1092 = vmul.f32 %v251, %v1013
        %v1093 = vmul.f32 %v252, %v1013
        %v1094 = vmul.f32 %v253, %v1013
        %v1095 = vmul.f32 %v254, %v1013
        %v1096 = vmul.f32 %v255, %v1013
        %v1097 = vmul.f32 %v256, %v1013
        %v1098 = vmul.f32 %v257, %v1013
        %v1099 = vmul.f32 %v258, %v1013
        %v1100 = vmul.f32 %v259, %v1013
        %v1101 = vmul.f32 %v260, %v1013
        %v1102 = vmul.f32 %v261, %v1013
        %v1103 = vmul.f32 %v262, %v1013
        %v1104 = vmul.f32 %v263, %v1013
        %v1105 = vmul.f32 %v264, %v1013
        %v1106 = vmul.f32 %v265, %v1013
        %v1107 = vmul.f32 %v266, %v1013
        %v1108 = vmul.f32 %v267, %v1013
        %v1109 = vmul.f32 %v268, %v1013
        %v1110 = vmul.f32 %v269, %v1017
        %v1111 = vmul.f32 %v270, %v1017
        %v1112 = vmul.f32 %v271, %v1017
        %v1113 = vmul.f32 %v272, %v1017
        %v1114 = vmul.f32 %v273, %v1017
        %v1115 = vmul.f32 %v274, %v1017
        %v1116 = vmul.f32 %v275, %v1017
        %v1117 = vmul.f32 %v276, %v1017
        %v1118 = vmul.f32 %v277, %v1017
        %v1119 = vmul.f32 %v278, %v1017
        %v1120 = vmul.f32 %v279, %v1017
        %v1121 = vmul.f32 %v280, %v1017
        %v1122 = vmul.f32 %v281, %v1017
        %v1123 = vmul.f32 %v282, %v1017
        %v1124 = vmul.f32 %v283, %v1017
        %v1125 = vmul.f32 %v284, %v1017
        %v1126 = vmul.f32 %v285, %v1017
        %v1127 = vmul.f32 %v286, %v1017
        %v1128 = vmul.f32 %v287, %v1017
        %v1129 = vmul.f32 %v288, %v1017
        %v1130 = vmul.f32 %v289, %v1017
        %v1131 = vmul.f32 %v290, %v1017
        %v1132 = vmul.f32 %v291, %v1017
        %v1133 = vmul.f32 %v292, %v1017
        %v1134 = vmul.f32 %v293, %v1017
        %v1135 = vmul.f32 %v294, %v1017
        %v1136 = vmul.f32 %v295, %v1017
        %v1137 = vmul.f32 %v296, %v1017
        %v1138 = vmul.f32 %v297, %v1017
        %v1139 = vmul.f32 %v298, %v1017
        %v1140 = vmul.f32 %v299, %v1017
        %v1141 = vmul.f32 %v300, %v1017
        %v1142 = vmul.f32 %v301, %v1021
        %v1143 = vmul.f32 %v302, %v1021
        %v1144 = vmul.f32 %v303, %v1021
        %v1145 = vmul.f32 %v304, %v1021
        %v1146 = vmul.f32 %v305, %v1021
        %v1147 = vmul.f32 %v306, %v1021
        %v1148 = vmul.f32 %v307, %v1021
        %v1149 = vmul.f32 %v308, %v1021
        %v1150 = vmul.f32 %v309, %v1021
        %v1151 = vmul.f32 %v310, %v1021
        %v1152 = vmul.f32 %v311, %v1021
        %v1153 = vmul.f32 %v312, %v1021
        %v1154 = vmul.f32 %v313, %v1021
        %v1155 = vmul.f32 %v314, %v1021
        %v1156 = vmul.f32 %v315, %v1021
        %v1157 = vmul.f32 %v316, %v1021
        %v1158 = vmul.f32 %v317, %v1021
        %v1159 = vmul.f32 %v318, %v1021
        %v1160 = vmul.f32 %v319, %v1021
        %v1161 = vmul.f32 %v320, %v1021
        %v1162 = vmul.f32 %v321, %v1021
        %v1163 = vmul.f32 %v322, %v1021
        %v1164 = vmul.f32 %v323, %v1021
        %v1165 = vmul.f32 %v324, %v1021
        %v1166 = vmul.f32 %v325, %v1021
        %v1167 = vmul.f32 %v326, %v1021
        %v1168 = vmul.f32 %v327, %v1021
        %v1169 = vmul.f32 %v328, %v1021
        %v1170 = vmul.f32 %v329, %v1021
        %v1171 = vmul.f32 %v330, %v1021
        %v1172 = vmul.f32 %v331, %v1021
        %v1173 = vmul.f32 %v332, %v1021
        %v1174 = vmul.f32 %v333, %v1025
        %v1175 = vmul.f32 %v334, %v1025
        %v1176 = vmul.f32 %v335, %v1025
        %v1177 = vmul.f32 %v336, %v1025
        %v1178 = vmul.f32 %v337, %v1025
        %v1179 = vmul.f32 %v338, %v1025
        %v1180 = vmul.f32 %v339, %v1025
        %v1181 = vmul.f32 %v340, %v1025
        %v1182 = vmul.f32 %v341, %v1025
        %v1183 = vmul.f32 %v342, %v1025
        %v1184 = vmul.f32 %v343, %v1025
        %v1185 = vmul.f32 %v344, %v1025
        %v1186 = vmul.f32 %v345, %v1025
        %v1187 = vmul.f32 %v346, %v1025
        %v1188 = vmul.f32 %v347, %v1025
        %v1189 = vmul.f32 %v348, %v1025
        %v1190 = vmul.f32 %v349, %v1025
        %v1191 = vmul.f32 %v350, %v1025
        %v1192 = vmul.f32 %v351, %v1025
        %v1193 = vmul.f32 %v352, %v1025
        %v1194 = vmul.f32 %v353, %v1025
        %v1195 = vmul.f32 %v354, %v1025
        %v1196 = vmul.f32 %v355, %v1025
        %v1197 = vmul.f32 %v356, %v1025
        %v1198 = vmul.f32 %v357, %v1025
        %v1199 = vmul.f32 %v358, %v1025
        %v1200 = vmul.f32 %v359, %v1025
        %v1201 = vmul.f32 %v360, %v1025
        %v1202 = vmul.f32 %v361, %v1025
        %v1203 = vmul.f32 %v362, %v1025
        %v1204 = vmul.f32 %v363, %v1025
        %v1205 = vmul.f32 %v364, %v1025
        %v1206 = vmul.f32 %v365, %v1029
        %v1207 = vmul.f32 %v366, %v1029
        %v1208 = vmul.f32 %v367, %v1029
        %v1209 = vmul.f32 %v368, %v1029
        %v1210 = vmul.f32 %v369, %v1029
        %v1211 = vmul.f32 %v370, %v1029
        %v1212 = vmul.f32 %v371, %v1029
        %v1213 = vmul.f32 %v372, %v1029
        %v1214 = vmul.f32 %v373, %v1029
        %v1215 = vmul.f32 %v374, %v1029
        %v1216 = vmul.f32 %v375, %v1029
        %v1217 = vmul.f32 %v376, %v1029
        %v1218 = vmul.f32 %v377, %v1029
        %v1219 = vmul.f32 %v378, %v1029
        %v1220 = vmul.f32 %v379, %v1029
        %v1221 = vmul.f32 %v380, %v1029
        %v1222 = vmul.f32 %v381, %v1029
        %v1223 = vmul.f32 %v382, %v1029
        %v1224 = vmul.f32 %v383, %v1029
        %v1225 = vmul.f32 %v384, %v1029
        %v1226 = vmul.f32 %v385, %v1029
        %v1227 = vmul.f32 %v386, %v1029
        %v1228 = vmul.f32 %v387, %v1029
        %v1229 = vmul.f32 %v388, %v1029
        %v1230 = vmul.f32 %v389, %v1029
        %v1231 = vmul.f32 %v390, %v1029
        %v1232 = vmul.f32 %v391, %v1029
        %v1233 = vmul.f32 %v392, %v1029
        %v1234 = vmul.f32 %v393, %v1029
        %v1235 = vmul.f32 %v394, %v1029
        %v1236 = vmul.f32 %v395, %v1029
        %v1237 = vmul.f32 %v396, %v1029
        %v1238 = vmul.f32 %v397, %v1033
        %v1239 = vmul.f32 %v398, %v1033
        %v1240 = vmul.f32 %v399, %v1033
        %v1241 = vmul.f32 %v400, %v1033
        %v1242 = vmul.f32 %v401, %v1033
        %v1243 = vmul.f32 %v402, %v1033
        %v1244 = vmul.f32 %v403, %v1033
        %v1245 = vmul.f32 %v404, %v1033
        %v1246 = vmul.f32 %v405, %v1033
        %v1247 = vmul.f32 %v406, %v1033
        %v1248 = vmul.f32 %v407, %v1033
        %v1249 = vmul.f32 %v408, %v1033
        %v1250 = vmul.f32 %v409, %v1033
        %v1251 = vmul.f32 %v410, %v1033
        %v1252 = vmul.f32 %v411, %v1033
        %v1253 = vmul.f32 %v412, %v1033
        %v1254 = vmul.f32 %v413, %v1033
        %v1255 = vmul.f32 %v414, %v1033
        %v1256 = vmul.f32 %v415, %v1033
        %v1257 = vmul.f32 %v416, %v1033
        %v1258 = vmul.f32 %v417, %v1033
        %v1259 = vmul.f32 %v418, %v1033
        %v1260 = vmul.f32 %v419, %v1033
        %v1261 = vmul.f32 %v420, %v1033
        %v1262 = vmul.f32 %v421, %v1033
        %v1263 = vmul.f32 %v422, %v1033
        %v1264 = vmul.f32 %v423, %v1033
        %v1265 = vmul.f32 %v424, %v1033
        %v1266 = vmul.f32 %v425, %v1033
        %v1267 = vmul.f32 %v426, %v1033
        %v1268 = vmul.f32 %v427, %v1033
        %v1269 = vmul.f32 %v428, %v1033
        %v1270 = vmul.f32 %v429, %v1037
        %v1271 = vmul.f32 %v430, %v1037
        %v1272 = vmul.f32 %v431, %v1037
        %v1273 = vmul.f32 %v432, %v1037
        %v1274 = vmul.f32 %v433, %v1037
        %v1275 = vmul.f32 %v434, %v1037
        %v1276 = vmul.f32 %v435, %v1037
        %v1277 = vmul.f32 %v436, %v1037
        %v1278 = vmul.f32 %v437, %v1037
        %v1279 = vmul.f32 %v438, %v1037
        %v1280 = vmul.f32 %v439, %v1037
        %v1281 = vmul.f32 %v440, %v1037
        %v1282 = vmul.f32 %v441, %v1037
        %v1283 = vmul.f32 %v442, %v1037
        %v1284 = vmul.f32 %v443, %v1037
        %v1285 = vmul.f32 %v444, %v1037
        %v1286 = vmul.f32 %v445, %v1037
        %v1287 = vmul.f32 %v446, %v1037
        %v1288 = vmul.f32 %v447, %v1037
        %v1289 = vmul.f32 %v448, %v1037
        %v1290 = vmul.f32 %v449, %v1037
        %v1291 = vmul.f32 %v450, %v1037
        %v1292 = vmul.f32 %v451, %v1037
        %v1293 = vmul.f32 %v452, %v1037
        %v1294 = vmul.f32 %v453, %v1037
        %v1295 = vmul.f32 %v454, %v1037
        %v1296 = vmul.f32 %v455, %v1037
        %v1297 = vmul.f32 %v456, %v1037
        %v1298 = vmul.f32 %v457, %v1037
        %v1299 = vmul.f32 %v458, %v1037
        %v1300 = vmul.f32 %v459, %v1037
        %v1301 = vmul.f32 %v460, %v1037
        %1302 = vst [vmem:[%s202] sm:$0xff] %v1046
        %1303 = vst [vmem:[%s202 + $0x8] sm:$0xff] %v1047
        %1304 = vst [vmem:[%s202 + $0x10] sm:$0xff] %v1048
        %1305 = vst [vmem:[%s202 + $0x18] sm:$0xff] %v1049
        %1306 = vst [vmem:[%s202 + $0x20] sm:$0xff] %v1050
        %1307 = vst [vmem:[%s202 + $0x28] sm:$0xff] %v1051
        %1308 = vst [vmem:[%s202 + $0x30] sm:$0xff] %v1052
        %1309 = vst [vmem:[%s202 + $0x38] sm:$0xff] %v1053
        %1310 = vst [vmem:[%s202 + $0x40] sm:$0xff] %v1054
        %1311 = vst [vmem:[%s202 + $0x48] sm:$0xff] %v1055
        %1312 = vst [vmem:[%s202 + $0x50] sm:$0xff] %v1056
        %1313 = vst [vmem:[%s202 + $0x58] sm:$0xff] %v1057
        %1314 = vst [vmem:[%s202 + $0x60] sm:$0xff] %v1058
        %1315 = vst [vmem:[%s202 + $0x68] sm:$0xff] %v1059
        %1316 = vst [vmem:[%s202 + $0x70] sm:$0xff] %v1060
        %1317 = vst [vmem:[%s202 + $0x78] sm:$0xff] %v1061
        %1318 = vst [vmem:[%s202 + $0x80] sm:$0xff] %v1062
        %1319 = vst [vmem:[%s202 + $0x88] sm:$0xff] %v1063
        %1320 = vst [vmem:[%s202 + $0x90] sm:$0xff] %v1064
        %1321 = vst [vmem:[%s202 + $0x98] sm:$0xff] %v1065
        %1322 = vst [vmem:[%s202 + $0xa0] sm:$0xff] %v1066
        %1323 = vst [vmem:[%s202 + $0xa8] sm:$0xff] %v1067
        %1324 = vst [vmem:[%s202 + $0xb0] sm:$0xff] %v1068
        %1325 = vst [vmem:[%s202 + $0xb8] sm:$0xff] %v1069
        %1326 = vst [vmem:[%s202 + $0xc0] sm:$0xff] %v1070
        %1327 = vst [vmem:[%s202 + $0xc8] sm:$0xff] %v1071
        %1328 = vst [vmem:[%s202 + $0xd0] sm:$0xff] %v1072
        %1329 = vst [vmem:[%s202 + $0xd8] sm:$0xff] %v1073
        %1330 = vst [vmem:[%s202 + $0xe0] sm:$0xff] %v1074
        %1331 = vst [vmem:[%s202 + $0xe8] sm:$0xff] %v1075
        %1332 = vst [vmem:[%s202 + $0xf0] sm:$0xff] %v1076
        %1333 = vst [vmem:[%s202 + $0xf8] sm:$0xff] %v1077
        %1334 = vst [vmem:[%s202 + $0x100] sm:$0xff] %v1078
        %1335 = vst [vmem:[%s202 + $0x108] sm:$0xff] %v1079
        %1336 = vst [vmem:[%s202 + $0x110] sm:$0xff] %v1080
        %1337 = vst [vmem:[%s202 + $0x118] sm:$0xff] %v1081
        %1338 = vst [vmem:[%s202 + $0x120] sm:$0xff] %v1082
        %1339 = vst [vmem:[%s202 + $0x128] sm:$0xff] %v1083
        %1340 = vst [vmem:[%s202 + $0x130] sm:$0xff] %v1084
        %1341 = vst [vmem:[%s202 + $0x138] sm:$0xff] %v1085
        %1342 = vst [vmem:[%s202 + $0x140] sm:$0xff] %v1086
        %1343 = vst [vmem:[%s202 + $0x148] sm:$0xff] %v1087
        %1344 = vst [vmem:[%s202 + $0x150] sm:$0xff] %v1088
        %1345 = vst [vmem:[%s202 + $0x158] sm:$0xff] %v1089
        %1346 = vst [vmem:[%s202 + $0x160] sm:$0xff] %v1090
        %1347 = vst [vmem:[%s202 + $0x168] sm:$0xff] %v1091
        %1348 = vst [vmem:[%s202 + $0x170] sm:$0xff] %v1092
        %1349 = vst [vmem:[%s202 + $0x178] sm:$0xff] %v1093
        %1350 = vst [vmem:[%s202 + $0x180] sm:$0xff] %v1094
        %1351 = vst [vmem:[%s202 + $0x188] sm:$0xff] %v1095
        %1352 = vst [vmem:[%s202 + $0x190] sm:$0xff] %v1096
        %1353 = vst [vmem:[%s202 + $0x198] sm:$0xff] %v1097
        %1354 = vst [vmem:[%s202 + $0x1a0] sm:$0xff] %v1098
        %1355 = vst [vmem:[%s202 + $0x1a8] sm:$0xff] %v1099
        %1356 = vst [vmem:[%s202 + $0x1b0] sm:$0xff] %v1100
        %1357 = vst [vmem:[%s202 + $0x1b8] sm:$0xff] %v1101
        %1358 = vst [vmem:[%s202 + $0x1c0] sm:$0xff] %v1102
        %1359 = vst [vmem:[%s202 + $0x1c8] sm:$0xff] %v1103
        %1360 = vst [vmem:[%s202 + $0x1d0] sm:$0xff] %v1104
        %1361 = vst [vmem:[%s202 + $0x1d8] sm:$0xff] %v1105
        %1362 = vst [vmem:[%s202 + $0x1e0] sm:$0xff] %v1106
        %1363 = vst [vmem:[%s202 + $0x1e8] sm:$0xff] %v1107
        %1364 = vst [vmem:[%s202 + $0x1f0] sm:$0xff] %v1108
        %1365 = vst [vmem:[%s202 + $0x1f8] sm:$0xff] %v1109
        %1366 = vst [vmem:[%s202 + $0x200] sm:$0xff] %v1110
        %1367 = vst [vmem:[%s202 + $0x208] sm:$0xff] %v1111
        %1368 = vst [vmem:[%s202 + $0x210] sm:$0xff] %v1112
        %1369 = vst [vmem:[%s202 + $0x218] sm:$0xff] %v1113
        %1370 = vst [vmem:[%s202 + $0x220] sm:$0xff] %v1114
        %1371 = vst [vmem:[%s202 + $0x228] sm:$0xff] %v1115
        %1372 = vst [vmem:[%s202 + $0x230] sm:$0xff] %v1116
        %1373 = vst [vmem:[%s202 + $0x238] sm:$0xff] %v1117
        %1374 = vst [vmem:[%s202 + $0x240] sm:$0xff] %v1118
        %1375 = vst [vmem:[%s202 + $0x248] sm:$0xff] %v1119
        %1376 = vst [vmem:[%s202 + $0x250] sm:$0xff] %v1120
        %1377 = vst [vmem:[%s202 + $0x258] sm:$0xff] %v1121
        %1378 = vst [vmem:[%s202 + $0x260] sm:$0xff] %v1122
        %1379 = vst [vmem:[%s202 + $0x268] sm:$0xff] %v1123
        %1380 = vst [vmem:[%s202 + $0x270] sm:$0xff] %v1124
        %1381 = vst [vmem:[%s202 + $0x278] sm:$0xff] %v1125
        %1382 = vst [vmem:[%s202 + $0x280] sm:$0xff] %v1126
        %1383 = vst [vmem:[%s202 + $0x288] sm:$0xff] %v1127
        %1384 = vst [vmem:[%s202 + $0x290] sm:$0xff] %v1128
        %1385 = vst [vmem:[%s202 + $0x298] sm:$0xff] %v1129
        %1386 = vst [vmem:[%s202 + $0x2a0] sm:$0xff] %v1130
        %1387 = vst [vmem:[%s202 + $0x2a8] sm:$0xff] %v1131
        %1388 = vst [vmem:[%s202 + $0x2b0] sm:$0xff] %v1132
        %1389 = vst [vmem:[%s202 + $0x2b8] sm:$0xff] %v1133
        %1390 = vst [vmem:[%s202 + $0x2c0] sm:$0xff] %v1134
        %1391 = vst [vmem:[%s202 + $0x2c8] sm:$0xff] %v1135
        %1392 = vst [vmem:[%s202 + $0x2d0] sm:$0xff] %v1136
        %1393 = vst [vmem:[%s202 + $0x2d8] sm:$0xff] %v1137
        %1394 = vst [vmem:[%s202 + $0x2e0] sm:$0xff] %v1138
        %1395 = vst [vmem:[%s202 + $0x2e8] sm:$0xff] %v1139
        %1396 = vst [vmem:[%s202 + $0x2f0] sm:$0xff] %v1140
        %1397 = vst [vmem:[%s202 + $0x2f8] sm:$0xff] %v1141
        %1398 = vst [vmem:[%s202 + $0x300] sm:$0xff] %v1142
        %1399 = vst [vmem:[%s202 + $0x308] sm:$0xff] %v1143
        %1400 = vst [vmem:[%s202 + $0x310] sm:$0xff] %v1144
        %1401 = vst [vmem:[%s202 + $0x318] sm:$0xff] %v1145
        %1402 = vst [vmem:[%s202 + $0x320] sm:$0xff] %v1146
        %1403 = vst [vmem:[%s202 + $0x328] sm:$0xff] %v1147
        %1404 = vst [vmem:[%s202 + $0x330] sm:$0xff] %v1148
        %1405 = vst [vmem:[%s202 + $0x338] sm:$0xff] %v1149
        %1406 = vst [vmem:[%s202 + $0x340] sm:$0xff] %v1150
        %1407 = vst [vmem:[%s202 + $0x348] sm:$0xff] %v1151
        %1408 = vst [vmem:[%s202 + $0x350] sm:$0xff] %v1152
        %1409 = vst [vmem:[%s202 + $0x358] sm:$0xff] %v1153
        %1410 = vst [vmem:[%s202 + $0x360] sm:$0xff] %v1154
        %1411 = vst [vmem:[%s202 + $0x368] sm:$0xff] %v1155
        %1412 = vst [vmem:[%s202 + $0x370] sm:$0xff] %v1156
        %1413 = vst [vmem:[%s202 + $0x378] sm:$0xff] %v1157
        %1414 = vst [vmem:[%s202 + $0x380] sm:$0xff] %v1158
        %1415 = vst [vmem:[%s202 + $0x388] sm:$0xff] %v1159
        %1416 = vst [vmem:[%s202 + $0x390] sm:$0xff] %v1160
        %1417 = vst [vmem:[%s202 + $0x398] sm:$0xff] %v1161
        %1418 = vst [vmem:[%s202 + $0x3a0] sm:$0xff] %v1162
        %1419 = vst [vmem:[%s202 + $0x3a8] sm:$0xff] %v1163
        %1420 = vst [vmem:[%s202 + $0x3b0] sm:$0xff] %v1164
        %1421 = vst [vmem:[%s202 + $0x3b8] sm:$0xff] %v1165
        %1422 = vst [vmem:[%s202 + $0x3c0] sm:$0xff] %v1166
        %1423 = vst [vmem:[%s202 + $0x3c8] sm:$0xff] %v1167
        %1424 = vst [vmem:[%s202 + $0x3d0] sm:$0xff] %v1168
        %1425 = vst [vmem:[%s202 + $0x3d8] sm:$0xff] %v1169
        %1426 = vst [vmem:[%s202 + $0x3e0] sm:$0xff] %v1170
        %1427 = vst [vmem:[%s202 + $0x3e8] sm:$0xff] %v1171
        %1428 = vst [vmem:[%s202 + $0x3f0] sm:$0xff] %v1172
        %1429 = vst [vmem:[%s202 + $0x3f8] sm:$0xff] %v1173
        %1430 = vst [vmem:[%s202 + $0x400] sm:$0xff] %v1174
        %1431 = vst [vmem:[%s202 + $0x408] sm:$0xff] %v1175
        %1432 = vst [vmem:[%s202 + $0x410] sm:$0xff] %v1176
        %1433 = vst [vmem:[%s202 + $0x418] sm:$0xff] %v1177
        %1434 = vst [vmem:[%s202 + $0x420] sm:$0xff] %v1178
        %1435 = vst [vmem:[%s202 + $0x428] sm:$0xff] %v1179
        %1436 = vst [vmem:[%s202 + $0x430] sm:$0xff] %v1180
        %1437 = vst [vmem:[%s202 + $0x438] sm:$0xff] %v1181
        %1438 = vst [vmem:[%s202 + $0x440] sm:$0xff] %v1182
        %1439 = vst [vmem:[%s202 + $0x448] sm:$0xff] %v1183
        %1440 = vst [vmem:[%s202 + $0x450] sm:$0xff] %v1184
        %1441 = vst [vmem:[%s202 + $0x458] sm:$0xff] %v1185
        %1442 = vst [vmem:[%s202 + $0x460] sm:$0xff] %v1186
        %1443 = vst [vmem:[%s202 + $0x468] sm:$0xff] %v1187
        %1444 = vst [vmem:[%s202 + $0x470] sm:$0xff] %v1188
        %1445 = vst [vmem:[%s202 + $0x478] sm:$0xff] %v1189
        %1446 = vst [vmem:[%s202 + $0x480] sm:$0xff] %v1190
        %1447 = vst [vmem:[%s202 + $0x488] sm:$0xff] %v1191
        %1448 = vst [vmem:[%s202 + $0x490] sm:$0xff] %v1192
        %1449 = vst [vmem:[%s202 + $0x498] sm:$0xff] %v1193
        %1450 = vst [vmem:[%s202 + $0x4a0] sm:$0xff] %v1194
        %1451 = vst [vmem:[%s202 + $0x4a8] sm:$0xff] %v1195
        %1452 = vst [vmem:[%s202 + $0x4b0] sm:$0xff] %v1196
        %1453 = vst [vmem:[%s202 + $0x4b8] sm:$0xff] %v1197
        %1454 = vst [vmem:[%s202 + $0x4c0] sm:$0xff] %v1198
        %1455 = vst [vmem:[%s202 + $0x4c8] sm:$0xff] %v1199
        %1456 = vst [vmem:[%s202 + $0x4d0] sm:$0xff] %v1200
        %1457 = vst [vmem:[%s202 + $0x4d8] sm:$0xff] %v1201
        %1458 = vst [vmem:[%s202 + $0x4e0] sm:$0xff] %v1202
        %1459 = vst [vmem:[%s202 + $0x4e8] sm:$0xff] %v1203
        %1460 = vst [vmem:[%s202 + $0x4f0] sm:$0xff] %v1204
        %1461 = vst [vmem:[%s202 + $0x4f8] sm:$0xff] %v1205
        %1462 = vst [vmem:[%s202 + $0x500] sm:$0xff] %v1206
        %1463 = vst [vmem:[%s202 + $0x508] sm:$0xff] %v1207
        %1464 = vst [vmem:[%s202 + $0x510] sm:$0xff] %v1208
        %1465 = vst [vmem:[%s202 + $0x518] sm:$0xff] %v1209
        %1466 = vst [vmem:[%s202 + $0x520] sm:$0xff] %v1210
        %1467 = vst [vmem:[%s202 + $0x528] sm:$0xff] %v1211
        %1468 = vst [vmem:[%s202 + $0x530] sm:$0xff] %v1212
        %1469 = vst [vmem:[%s202 + $0x538] sm:$0xff] %v1213
        %1470 = vst [vmem:[%s202 + $0x540] sm:$0xff] %v1214
        %1471 = vst [vmem:[%s202 + $0x548] sm:$0xff] %v1215
        %1472 = vst [vmem:[%s202 + $0x550] sm:$0xff] %v1216
        %1473 = vst [vmem:[%s202 + $0x558] sm:$0xff] %v1217
        %1474 = vst [vmem:[%s202 + $0x560] sm:$0xff] %v1218
        %1475 = vst [vmem:[%s202 + $0x568] sm:$0xff] %v1219
        %1476 = vst [vmem:[%s202 + $0x570] sm:$0xff] %v1220
        %1477 = vst [vmem:[%s202 + $0x578] sm:$0xff] %v1221
        %1478 = vst [vmem:[%s202 + $0x580] sm:$0xff] %v1222
        %1479 = vst [vmem:[%s202 + $0x588] sm:$0xff] %v1223
        %1480 = vst [vmem:[%s202 + $0x590] sm:$0xff] %v1224
        %1481 = vst [vmem:[%s202 + $0x598] sm:$0xff] %v1225
        %1482 = vst [vmem:[%s202 + $0x5a0] sm:$0xff] %v1226
        %1483 = vst [vmem:[%s202 + $0x5a8] sm:$0xff] %v1227
        %1484 = vst [vmem:[%s202 + $0x5b0] sm:$0xff] %v1228
        %1485 = vst [vmem:[%s202 + $0x5b8] sm:$0xff] %v1229
        %1486 = vst [vmem:[%s202 + $0x5c0] sm:$0xff] %v1230
        %1487 = vst [vmem:[%s202 + $0x5c8] sm:$0xff] %v1231
        %1488 = vst [vmem:[%s202 + $0x5d0] sm:$0xff] %v1232
        %1489 = vst [vmem:[%s202 + $0x5d8] sm:$0xff] %v1233
        %1490 = vst [vmem:[%s202 + $0x5e0] sm:$0xff] %v1234
        %1491 = vst [vmem:[%s202 + $0x5e8] sm:$0xff] %v1235
        %1492 = vst [vmem:[%s202 + $0x5f0] sm:$0xff] %v1236
        %1493 = vst [vmem:[%s202 + $0x5f8] sm:$0xff] %v1237
        %1494 = vst [vmem:[%s202 + $0x600] sm:$0xff] %v1238
        %1495 = vst [vmem:[%s202 + $0x608] sm:$0xff] %v1239
        %1496 = vst [vmem:[%s202 + $0x610] sm:$0xff] %v1240
        %1497 = vst [vmem:[%s202 + $0x618] sm:$0xff] %v1241
        %1498 = vst [vmem:[%s202 + $0x620] sm:$0xff] %v1242
        %1499 = vst [vmem:[%s202 + $0x628] sm:$0xff] %v1243
        %1500 = vst [vmem:[%s202 + $0x630] sm:$0xff] %v1244
        %1501 = vst [vmem:[%s202 + $0x638] sm:$0xff] %v1245
        %1502 = vst [vmem:[%s202 + $0x640] sm:$0xff] %v1246
        %1503 = vst [vmem:[%s202 + $0x648] sm:$0xff] %v1247
        %1504 = vst [vmem:[%s202 + $0x650] sm:$0xff] %v1248
        %1505 = vst [vmem:[%s202 + $0x658] sm:$0xff] %v1249
        %1506 = vst [vmem:[%s202 + $0x660] sm:$0xff] %v1250
        %1507 = vst [vmem:[%s202 + $0x668] sm:$0xff] %v1251
        %1508 = vst [vmem:[%s202 + $0x670] sm:$0xff] %v1252
        %1509 = vst [vmem:[%s202 + $0x678] sm:$0xff] %v1253
        %1510 = vst [vmem:[%s202 + $0x680] sm:$0xff] %v1254
        %1511 = vst [vmem:[%s202 + $0x688] sm:$0xff] %v1255
        %1512 = vst [vmem:[%s202 + $0x690] sm:$0xff] %v1256
        %1513 = vst [vmem:[%s202 + $0x698] sm:$0xff] %v1257
        %1514 = vst [vmem:[%s202 + $0x6a0] sm:$0xff] %v1258
        %1515 = vst [vmem:[%s202 + $0x6a8] sm:$0xff] %v1259
        %1516 = vst [vmem:[%s202 + $0x6b0] sm:$0xff] %v1260
        %1517 = vst [vmem:[%s202 + $0x6b8] sm:$0xff] %v1261
        %1518 = vst [vmem:[%s202 + $0x6c0] sm:$0xff] %v1262
        %1519 = vst [vmem:[%s202 + $0x6c8] sm:$0xff] %v1263
        %1520 = vst [vmem:[%s202 + $0x6d0] sm:$0xff] %v1264
        %1521 = vst [vmem:[%s202 + $0x6d8] sm:$0xff] %v1265
        %1522 = vst [vmem:[%s202 + $0x6e0] sm:$0xff] %v1266
        %1523 = vst [vmem:[%s202 + $0x6e8] sm:$0xff] %v1267
        %1524 = vst [vmem:[%s202 + $0x6f0] sm:$0xff] %v1268
        %1525 = vst [vmem:[%s202 + $0x6f8] sm:$0xff] %v1269
        %1526 = vst [vmem:[%s202 + $0x700] sm:$0xff] %v1270
        %1527 = vst [vmem:[%s202 + $0x708] sm:$0xff] %v1271
        %1528 = vst [vmem:[%s202 + $0x710] sm:$0xff] %v1272
        %1529 = vst [vmem:[%s202 + $0x718] sm:$0xff] %v1273
        %1530 = vst [vmem:[%s202 + $0x720] sm:$0xff] %v1274
        %1531 = vst [vmem:[%s202 + $0x728] sm:$0xff] %v1275
        %1532 = vst [vmem:[%s202 + $0x730] sm:$0xff] %v1276
        %1533 = vst [vmem:[%s202 + $0x738] sm:$0xff] %v1277
        %1534 = vst [vmem:[%s202 + $0x740] sm:$0xff] %v1278
        %1535 = vst [vmem:[%s202 + $0x748] sm:$0xff] %v1279
        %1536 = vst [vmem:[%s202 + $0x750] sm:$0xff] %v1280
        %1537 = vst [vmem:[%s202 + $0x758] sm:$0xff] %v1281
        %1538 = vst [vmem:[%s202 + $0x760] sm:$0xff] %v1282
        %1539 = vst [vmem:[%s202 + $0x768] sm:$0xff] %v1283
        %1540 = vst [vmem:[%s202 + $0x770] sm:$0xff] %v1284
        %1541 = vst [vmem:[%s202 + $0x778] sm:$0xff] %v1285
        %1542 = vst [vmem:[%s202 + $0x780] sm:$0xff] %v1286
        %1543 = vst [vmem:[%s202 + $0x788] sm:$0xff] %v1287
        %1544 = vst [vmem:[%s202 + $0x790] sm:$0xff] %v1288
        %1545 = vst [vmem:[%s202 + $0x798] sm:$0xff] %v1289
        %1546 = vst [vmem:[%s202 + $0x7a0] sm:$0xff] %v1290
        %1547 = vst [vmem:[%s202 + $0x7a8] sm:$0xff] %v1291
        %1548 = vst [vmem:[%s202 + $0x7b0] sm:$0xff] %v1292
        %1549 = vst [vmem:[%s202 + $0x7b8] sm:$0xff] %v1293
        %1550 = vst [vmem:[%s202 + $0x7c0] sm:$0xff] %v1294
        %1551 = vst [vmem:[%s202 + $0x7c8] sm:$0xff] %v1295
        %1552 = vst [vmem:[%s202 + $0x7d0] sm:$0xff] %v1296
        %1553 = vst [vmem:[%s202 + $0x7d8] sm:$0xff] %v1297
        %1554 = vst [vmem:[%s202 + $0x7e0] sm:$0xff] %v1298
        %1555 = vst [vmem:[%s202 + $0x7e8] sm:$0xff] %v1299
        %1556 = vst [vmem:[%s202 + $0x7f0] sm:$0xff] %v1300
        %1557 = vst [vmem:[%s202 + $0x7f8] sm:$0xff] %v1301
        %s1558 = sand.u32 %s97, 1
        %s1559 = scalar_lea.sflag [#allocation4], %s1558
        %s1560 = sand.u32 %s97, 1
        %s1561 = smul.addr %s1560, 2048
        %s1562 = scalar_lea.vmem [#allocation7], %s1561
        // Predicated region
        $region41: #{tpu_custom_call.1} parent=31 // pred_check
          %p1563 = pneg %p107
        $region42: #{tpu_custom_call.1} parent=31 // pred_check_branch
          %1565 = sbr.rel (%p1563) target = $region44
        $region43: #{tpu_custom_call.1} parent=31 // pred_region
          %s1566 = smul.u32 8, %s21
          %s1568 = ssub.s32 32768, 32768
          %1569 = vsyncadd %s1559, %s1568
          %s1570 = smul.addr %s1566, 32
          %s1571 = smul.addr %s1570, 128
          %s1572 = scalar_lea.hbm %s3, %s1571
          %s1573 = sshll.u32 %s1562, 4
          %s1574 = int_to_ptr.vmem [resolvable:$true] %s1573
          %1579 = dma.vmem_to_hbm [thread:$0]  %s1574, 32768, %s1572, %s1559, 128, 128, 8
        $region44: #{tpu_custom_call.1} parent=31 // pred_fallthru
          _
      $region32: #{tpu_custom_call.1} parent=5 // pred_fallthru
        _
      %p1580 = scmp.le.s32.totalorder 2, %s16
      // Predicated region
      $region45: #{tpu_custom_call.1} parent=5 // pred_check
        %p1581 = pneg %p1580
      $region46: #{tpu_custom_call.1} parent=5 // pred_check_branch
        %1583 = sbr.rel (%p1581) target = $region48
      $region47: #{tpu_custom_call.1} parent=5 // pred_region
        %s1584 = ssub.s32 %s16, 2
        // Predicated region
        $region49: #{tpu_custom_call.1} parent=47 // pred_check
          %p1585 = pneg %p113
        $region50: #{tpu_custom_call.1} parent=47 // pred_check_branch
          %1587 = sbr.rel (%p1585) target = $region52
        $region51: #{tpu_custom_call.1} parent=47 // pred_region
          %s1588 = sand.u32 %s98, 1
          %s1589 = scalar_lea.sflag [#allocation4], %s1588
          %s1590 = sand.u32 %s98, 1
          %s1591 = smul.addr %s1590, 2048
          %s1592 = scalar_lea.vmem [#allocation7], %s1591
          %1593 = dma.done %s1589, 32768
        $region52: #{tpu_custom_call.1} parent=47 // pred_fallthru
          _
      $region48: #{tpu_custom_call.1} parent=5 // pred_fallthru
        _
    $region6: #{tpu_custom_call.1} parent=1 // loop_footer
      %s20 = sadd.s32 1, %s16
    $region7: #{tpu_custom_call.1} parent=1 // loop_footer_branch
      %15 = sbr.rel target = $region3
    $region8: #{tpu_custom_call.1} parent=1 // loop_exit
      _
    %1594 = vsyncpa [#allocation3], 1
    %s1595 = scalar_lea.sflag [#allocation3], 1
    %1596 = vsyncpa %s1595, 1
    %1597 = vsyncpa [#allocation6], 1
    %1598 = vsyncpa [#allocation4], 1
    %s1599 = scalar_lea.sflag [#allocation4], 1
    %1600 = vsyncpa %s1599, 1

</llo_original>
